<compile_context>
chip_gen: v7x
topology: tpu7x:2x2x1
jax: 0.10.0
libtpu: 0.0.40
codegen_flags: <defaults>
</compile_context>

<pallas_src>
import functools
import math

import jax
import jax.numpy as jnp
import numpy as np
from jax.experimental import pallas as pl
from jax.experimental.pallas import tpu as pltpu


def mha_kernel(valid_ref, q_ref, k_ref, v_ref, wq_ref, wk_ref, wv_ref, wo_ref,
               o_ref, *, num_heads, refine_recip):
    """One grid step = full multi-head attention for one batch element.

    Weight refs are head-major:
      wq/wk/wv : (H, D, head_dim)      wo : (H, head_dim, NH_pad)
    so per-head access never slices the lane dimension of an activation.
    """
    b = pl.program_id(0)
    cdt = wq_ref.dtype                      # MXU compute dtype (f32 or bf16)

    # Cast activations exactly once per grid step.
    q = q_ref[0].astype(cdt)                # (Sq, Dq)
    k = k_ref[0].astype(cdt)                # (Sk, Dk)
    v = v_ref[0].astype(cdt)                # (Sk, Dv)

    Sq = q.shape[0]
    Sk = k.shape[0]

    # masked_softmax semantics: key positions >= valid_len get score -1e6.
    vl = valid_ref[b]
    col = jax.lax.broadcasted_iota(jnp.int32, (Sq, Sk), 1)
    mask = col < vl

    acc = None                              # f32 (Sq, NH_pad) output accumulator
    for h in range(num_heads):              # static unroll, H is small
        # Per-head projections; W_q already carries the 1/sqrt(head_dim) scale.
        # wX_ref[h] is a leading-dim offset -> no lane relayout.
        qh = jnp.dot(q, wq_ref[h], preferred_element_type=cdt)      # (Sq, hd)
        kh = jnp.dot(k, wk_ref[h], preferred_element_type=cdt)      # (Sk, hd)
        vh = jnp.dot(v, wv_ref[h], preferred_element_type=cdt)      # (Sk, hd)

        # Q @ K^T without an explicit transpose: contract the last dims.
        s = jax.lax.dot_general(qh, kh, (((1,), (1,)), ((), ())),
                                preferred_element_type=jnp.float32)  # (Sq, Sk)
        s = jnp.where(mask, s, jnp.float32(-1e6))

        # Softmax numerator in f32; normalization deferred until after PV.
        m = jnp.max(s, axis=-1, keepdims=True)
        e = jnp.exp(s - m)
        denom = jnp.sum(e, axis=-1, keepdims=True)
        r = pl.reciprocal(denom, approx=True)        # EUP slot, near-free
        if refine_recip:                             # one Newton step ≈ f32-exact
            r = r * (2.0 - denom * r)

        o_h = jnp.dot(e.astype(cdt), vh,
                      preferred_element_type=jnp.float32) * r        # (Sq, hd)

        # Output projection folded into the loop: no concat of sub-128-wide
        # head outputs, exactly one f32 accumulator stays live.
        contrib = jnp.dot(o_h.astype(cdt), wo_ref[h],
                          preferred_element_type=jnp.float32)        # (Sq, NHp)
        acc = contrib if acc is None else acc + contrib

    # Single lane-dense store of the whole output block.
    o_ref[0] = acc.astype(o_ref.dtype)


def multi_head_attention(queries, keys, values, valid_lens,
                         wq, wk, wv, wo, num_heads, compute_dtype=None):
    B, Sq, Dq = queries.shape
    _, Sk, Dk = keys.shape
    Dv = values.shape[-1]
    NH = wq.shape[-1]
    assert NH % num_heads == 0
    hd = NH // num_heads

    if compute_dtype is None:
        compute_dtype = queries.dtype
    compute_dtype = jnp.dtype(compute_dtype)
    out_dtype = queries.dtype
    # f32 path: Newton-refine the EUP approx reciprocal for tight accuracy.
    refine_recip = compute_dtype == jnp.dtype(jnp.float32)

    if valid_lens is None:
        valid_lens = jnp.full((B,), Sk, dtype=jnp.int32)
    valid_lens = valid_lens.astype(jnp.int32)

    # Head-major weight layouts (per-head slice = leading-dim offset in kernel).
    # Fold the 1/sqrt(head_dim) attention scale into W_q on the host.
    scale = jnp.asarray(1.0 / math.sqrt(hd), wq.dtype)
    wq_h = (wq * scale).reshape(Dq, num_heads, hd).transpose(1, 0, 2)
    wk_h = wk.reshape(Dk, num_heads, hd).transpose(1, 0, 2)
    wv_h = wv.reshape(Dv, num_heads, hd).transpose(1, 0, 2)
    wq_h = wq_h.astype(compute_dtype)
    wk_h = wk_h.astype(compute_dtype)
    wv_h = wv_h.astype(compute_dtype)

    # Output-projection rows, head-major; pad the lane dim to a multiple of 128
    # ONLY when needed so the kernel's single output store is lane-dense.
    LANE = 128
    NH_pad = NH if NH % LANE == 0 else ((NH + LANE - 1) // LANE) * LANE
    wo_h = wo.reshape(num_heads, hd, NH).astype(compute_dtype)
    if NH_pad != NH:
        wo_h = jnp.zeros((num_heads, hd, NH_pad), compute_dtype).at[:, :, :NH].set(wo_h)

    grid_spec = pltpu.PrefetchScalarGridSpec(
        num_scalar_prefetch=1,
        grid=(B,),
        in_specs=[
            pl.BlockSpec((1, Sq, Dq), lambda b, vl: (b, 0, 0)),
            pl.BlockSpec((1, Sk, Dk), lambda b, vl: (b, 0, 0)),
            pl.BlockSpec((1, Sk, Dv), lambda b, vl: (b, 0, 0)),
            # Constant index maps: weight blocks are fetched once and reused.
            pl.BlockSpec((num_heads, Dq, hd), lambda b, vl: (0, 0, 0)),
            pl.BlockSpec((num_heads, Dk, hd), lambda b, vl: (0, 0, 0)),
            pl.BlockSpec((num_heads, Dv, hd), lambda b, vl: (0, 0, 0)),
            pl.BlockSpec((num_heads, hd, NH_pad), lambda b, vl: (0, 0, 0)),
        ],
        out_specs=pl.BlockSpec((1, Sq, NH_pad), lambda b, vl: (b, 0, 0)),
    )

    # Advisory cost estimate for XLA scheduling around the custom call.
    flops = 2 * B * (Sq * Dq * NH + Sk * Dk * NH + Sk * Dv * NH
                     + num_heads * Sq * Sk * hd * 2
                     + Sq * NH * NH_pad)
    transcendentals = B * num_heads * Sq * (Sk + 1)
    bytes_accessed = (
        queries.size * queries.dtype.itemsize
        + keys.size * keys.dtype.itemsize
        + values.size * values.dtype.itemsize
        + valid_lens.size * 4
        + (wq_h.size + wk_h.size + wv_h.size + wo_h.size) * compute_dtype.itemsize
        + B * Sq * NH_pad * np.dtype(out_dtype).itemsize)
    cost = pl.CostEstimate(flops=int(flops),
                           transcendentals=int(transcendentals),
                           bytes_accessed=int(bytes_accessed))

    # Explicit scoped-VMEM limit (blocks, weights, generous headroom for the
    # in-kernel f32 intermediates), clamped to be safe on all generations.
    act_bytes = 2 * (Sq * Dq + Sk * Dk + Sk * Dv) * queries.dtype.itemsize
    out_bytes = 2 * Sq * NH_pad * np.dtype(out_dtype).itemsize
    w_bytes = 2 * (wq_h.size + wk_h.size + wv_h.size + wo_h.size) * compute_dtype.itemsize
    vmem_limit = int(min(max(8 * (act_bytes + out_bytes + w_bytes) + (4 << 20),
                             32 << 20), 64 << 20))

    kernel = functools.partial(mha_kernel, num_heads=num_heads,
                               refine_recip=refine_recip)

    out = pl.pallas_call(
        kernel,
        out_shape=jax.ShapeDtypeStruct((B, Sq, NH_pad), out_dtype),
        grid_spec=grid_spec,
        compiler_params=pltpu.CompilerParams(
            dimension_semantics=("parallel",),
            vmem_limit_bytes=vmem_limit),
        cost_estimate=cost,
    )(valid_lens, queries, keys, values, wq_h, wk_h, wv_h, wo_h)

    return out[..., :NH] if NH_pad != NH else out


def reference(queries, keys, values, valid_lens, wq, wk, wv, wo, num_heads):
    """Pure-JAX mirror of the PyTorch MultiHeadAttention forward (eval mode)."""
    def transpose_qkv(x):
        B, S, _ = x.shape
        x = x.reshape(B, S, num_heads, -1).transpose(0, 2, 1, 3)
        return x.reshape(B * num_heads, S, -1)

    q = transpose_qkv(queries @ wq)
    k = transpose_qkv(keys @ wk)
    v = transpose_qkv(values @ wv)
    vl = jnp.repeat(valid_lens, num_heads, axis=0)            # (B*H,)

    d = q.shape[-1]
    scores = jnp.einsum('bqd,bkd->bqk', q, k) / math.sqrt(d)
    mask = jnp.arange(scores.shape[-1])[None, None, :] < vl[:, None, None]
    scores = jnp.where(mask, scores, -1e6)
    attn = jax.nn.softmax(scores, axis=-1)
    out = jnp.einsum('bqk,bkd->bqd', attn, v)                 # (B*H, Sq, hd)

    B = queries.shape[0]
    out = out.reshape(B, num_heads, out.shape[1], -1).transpose(0, 2, 1, 3)
    out = out.reshape(B, out.shape[1], -1)                    # (B, Sq, NH)
    return out @ wo


if __name__ == "__main__":
    B, S, D, NH, H = 2, 8, 32, 32, 4   # batch, seq, feature, num_hiddens, heads

    key = jax.random.PRNGKey(0)
    kq, kk, kv, kwq, kwk, kwv, kwo = jax.random.split(key, 7)

    queries = jax.random.normal(kq, (B, S, D), dtype=jnp.float32)
    keys_in = jax.random.normal(kk, (B, S, D), dtype=jnp.float32)
    values = jax.random.normal(kv, (B, S, D), dtype=jnp.float32)
    valid_lens = jnp.array([3, 6], dtype=jnp.int32)

    scale = 0.1
    wq = scale * jax.random.normal(kwq, (D, NH), dtype=jnp.float32)
    wk = scale * jax.random.normal(kwk, (D, NH), dtype=jnp.float32)
    wv = scale * jax.random.normal(kwv, (D, NH), dtype=jnp.float32)
    wo = scale * jax.random.normal(kwo, (NH, NH), dtype=jnp.float32)

    ref = reference(queries, keys_in, values, valid_lens, wq, wk, wv, wo, H)

    # f32 MXU path: tight tolerance (approx reciprocal + one Newton step).
    out_f32 = multi_head_attention(queries, keys_in, values, valid_lens,
                                   wq, wk, wv, wo, num_heads=H)
    out_f32 = jax.block_until_ready(out_f32)
    np.testing.assert_allclose(np.asarray(out_f32), np.asarray(ref),
                               rtol=2e-5, atol=2e-5)

    # bf16-into-MXU path (perf mode on v5e/v6e/v7x): bf16-level tolerance.
    out_bf16 = multi_head_attention(queries, keys_in, values, valid_lens,
                                    wq, wk, wv, wo, num_heads=H,
                                    compute_dtype=jnp.bfloat16)
    out_bf16 = jax.block_until_ready(out_bf16)
    np.testing.assert_allclose(np.asarray(out_bf16), np.asarray(ref),
                               rtol=5e-2, atol=5e-2)

    print("KERNEL_OK")
</pallas_src>

<mosaic_0001>
module attributes {stable_mosaic.version = 11 : i64} {
  func.func @mha_kernel(%arg0: i32, %arg1: memref<2xi32, #tpu.memory_space<smem>>, %arg2: memref<1x8x32xf32, #tpu.memory_space<vmem>>, %arg3: memref<1x8x32xf32, #tpu.memory_space<vmem>>, %arg4: memref<1x8x32xf32, #tpu.memory_space<vmem>>, %arg5: memref<4x32x8xf32, #tpu.memory_space<vmem>>, %arg6: memref<4x32x8xf32, #tpu.memory_space<vmem>>, %arg7: memref<4x32x8xf32, #tpu.memory_space<vmem>>, %arg8: memref<4x8x128xf32, #tpu.memory_space<vmem>>, %arg9: memref<1x8x128xf32, #tpu.memory_space<vmem>>) attributes {dimension_semantics = [#tpu.dimension_semantics<parallel>], iteration_bounds = array<i64: 2>, scalar_prefetch = 1 : i64, scratch_operands = 0 : i64, tpu.core_type = #tpu.core_type<tc>, window_params = [{transform_indices = @transform_0, window_bounds = array<i64: 1, 8, 32>}, {transform_indices = @transform_1, window_bounds = array<i64: 1, 8, 32>}, {transform_indices = @transform_2, window_bounds = array<i64: 1, 8, 32>}, {pipeline_mode = #tpu.pipeline_mode<synchronous>, transform_indices = @transform_3, window_bounds = array<i64: 4, 32, 8>}, {pipeline_mode = #tpu.pipeline_mode<synchronous>, transform_indices = @transform_4, window_bounds = array<i64: 4, 32, 8>}, {pipeline_mode = #tpu.pipeline_mode<synchronous>, transform_indices = @transform_5, window_bounds = array<i64: 4, 32, 8>}, {pipeline_mode = #tpu.pipeline_mode<synchronous>, transform_indices = @transform_6, window_bounds = array<i64: 4, 8, 128>}, {transform_indices = @transform_7, window_bounds = array<i64: 1, 8, 128>}]} {
    %c0 = arith.constant 0 : index
    %c0_0 = arith.constant 0 : index
    %c0_1 = arith.constant 0 : index
    %0 = vector.load %arg2[%c0, %c0_0, %c0_1] : memref<1x8x32xf32, #tpu.memory_space<vmem>>, vector<1x8x32xf32>
    %1 = vector.shape_cast %0 : vector<1x8x32xf32> to vector<8x32xf32>
    %c0_2 = arith.constant 0 : index
    %c0_3 = arith.constant 0 : index
    %c0_4 = arith.constant 0 : index
    %2 = vector.load %arg3[%c0_2, %c0_3, %c0_4] : memref<1x8x32xf32, #tpu.memory_space<vmem>>, vector<1x8x32xf32>
    %3 = vector.shape_cast %2 : vector<1x8x32xf32> to vector<8x32xf32>
    %c0_5 = arith.constant 0 : index
    %c0_6 = arith.constant 0 : index
    %c0_7 = arith.constant 0 : index
    %4 = vector.load %arg4[%c0_5, %c0_6, %c0_7] : memref<1x8x32xf32, #tpu.memory_space<vmem>>, vector<1x8x32xf32>
    %5 = vector.shape_cast %4 : vector<1x8x32xf32> to vector<8x32xf32>
    %6 = arith.index_cast %arg0 : i32 to index
    %7 = memref.load %arg1[%6] : memref<2xi32, #tpu.memory_space<smem>>
    %8 = tpu.iota {dimensions = array<i32: 1>} : vector<8x8xi32>
    %9 = vector.broadcast %7 : i32 to vector<8x8xi32>
    %10 = arith.cmpi slt, %8, %9 : vector<8x8xi32>
    %c0_8 = arith.constant 0 : index
    %c0_9 = arith.constant 0 : index
    %c0_10 = arith.constant 0 : index
    %11 = vector.load %arg5[%c0_8, %c0_9, %c0_10] : memref<4x32x8xf32, #tpu.memory_space<vmem>>, vector<1x32x8xf32>
    %12 = vector.shape_cast %11 : vector<1x32x8xf32> to vector<32x8xf32>
    %cst = arith.constant dense<0.000000e+00> : vector<8x8xf32>
    %13 = tpu.matmul %1, %12, %cst {dimension_numbers = #tpu.dot_dimension_numbers<[1], [0], [0], [1], [0, 0, 1, 1], [], []>} : vector<8x32xf32>, vector<32x8xf32>, vector<8x8xf32> -> vector<8x8xf32>
    %c0_11 = arith.constant 0 : index
    %c0_12 = arith.constant 0 : index
    %c0_13 = arith.constant 0 : index
    %14 = vector.load %arg6[%c0_11, %c0_12, %c0_13] : memref<4x32x8xf32, #tpu.memory_space<vmem>>, vector<1x32x8xf32>
    %15 = vector.shape_cast %14 : vector<1x32x8xf32> to vector<32x8xf32>
    %cst_14 = arith.constant dense<0.000000e+00> : vector<8x8xf32>
    %16 = tpu.matmul %3, %15, %cst_14 {dimension_numbers = #tpu.dot_dimension_numbers<[1], [0], [0], [1], [0, 0, 1, 1], [], []>} : vector<8x32xf32>, vector<32x8xf32>, vector<8x8xf32> -> vector<8x8xf32>
    %c0_15 = arith.constant 0 : index
    %c0_16 = arith.constant 0 : index
    %c0_17 = arith.constant 0 : index
    %17 = vector.load %arg7[%c0_15, %c0_16, %c0_17] : memref<4x32x8xf32, #tpu.memory_space<vmem>>, vector<1x32x8xf32>
    %18 = vector.shape_cast %17 : vector<1x32x8xf32> to vector<32x8xf32>
    %cst_18 = arith.constant dense<0.000000e+00> : vector<8x8xf32>
    %19 = tpu.matmul %5, %18, %cst_18 {dimension_numbers = #tpu.dot_dimension_numbers<[1], [0], [0], [1], [0, 0, 1, 1], [], []>} : vector<8x32xf32>, vector<32x8xf32>, vector<8x8xf32> -> vector<8x8xf32>
    %cst_19 = arith.constant dense<0.000000e+00> : vector<8x8xf32>
    %20 = tpu.matmul %13, %16, %cst_19 {dimension_numbers = #tpu.dot_dimension_numbers<[1], [1], [0], [0], [0, 0, 1, 0], [], []>} : vector<8x8xf32>, vector<8x8xf32>, vector<8x8xf32> -> vector<8x8xf32>
    %cst_20 = arith.constant -1.000000e+06 : f32
    %21 = vector.broadcast %cst_20 : f32 to vector<8x8xf32>
    %22 = arith.select %10, %20, %21 : vector<8x8xi1>, vector<8x8xf32>
    %cst_21 = arith.constant dense<0xFF800000> : vector<8xf32>
    %23 = vector.multi_reduction <maximumf>, %22, %cst_21 [1] : vector<8x8xf32> to vector<8xf32>
    %24 = vector.shape_cast %23 : vector<8xf32> to vector<8x1xf32>
    %25 = vector.broadcast %24 : vector<8x1xf32> to vector<8x8xf32>
    %26 = arith.subf %22, %25 : vector<8x8xf32>
    %27 = math.exp %26 : vector<8x8xf32>
    %cst_22 = arith.constant dense<0.000000e+00> : vector<8xf32>
    %28 = vector.multi_reduction <add>, %27, %cst_22 [1] : vector<8x8xf32> to vector<8xf32>
    %29 = vector.shape_cast %28 : vector<8xf32> to vector<8x1xf32>
    %30 = tpu.reciprocal %29 {approx = true} : vector<8x1xf32> -> vector<8x1xf32>
    %31 = arith.mulf %29, %30 : vector<8x1xf32>
    %cst_23 = arith.constant 2.000000e+00 : f32
    %32 = vector.broadcast %cst_23 : f32 to vector<8x1xf32>
    %33 = arith.subf %32, %31 : vector<8x1xf32>
    %34 = arith.mulf %30, %33 : vector<8x1xf32>
    %cst_24 = arith.constant dense<0.000000e+00> : vector<8x8xf32>
    %35 = tpu.matmul %27, %19, %cst_24 {dimension_numbers = #tpu.dot_dimension_numbers<[1], [0], [0], [1], [0, 0, 1, 1], [], []>} : vector<8x8xf32>, vector<8x8xf32>, vector<8x8xf32> -> vector<8x8xf32>
    %36 = vector.broadcast %34 : vector<8x1xf32> to vector<8x8xf32>
    %37 = arith.mulf %35, %36 : vector<8x8xf32>
    %c0_25 = arith.constant 0 : index
    %c0_26 = arith.constant 0 : index
    %c0_27 = arith.constant 0 : index
    %38 = vector.load %arg8[%c0_25, %c0_26, %c0_27] : memref<4x8x128xf32, #tpu.memory_space<vmem>>, vector<1x8x128xf32>
    %39 = vector.shape_cast %38 : vector<1x8x128xf32> to vector<8x128xf32>
    %cst_28 = arith.constant dense<0.000000e+00> : vector<8x128xf32>
    %40 = tpu.matmul %37, %39, %cst_28 {dimension_numbers = #tpu.dot_dimension_numbers<[1], [0], [0], [1], [0, 0, 1, 1], [], []>} : vector<8x8xf32>, vector<8x128xf32>, vector<8x128xf32> -> vector<8x128xf32>
    %c1 = arith.constant 1 : index
    %c0_29 = arith.constant 0 : index
    %c0_30 = arith.constant 0 : index
    %41 = vector.load %arg5[%c1, %c0_29, %c0_30] : memref<4x32x8xf32, #tpu.memory_space<vmem>>, vector<1x32x8xf32>
    %42 = vector.shape_cast %41 : vector<1x32x8xf32> to vector<32x8xf32>
    %cst_31 = arith.constant dense<0.000000e+00> : vector<8x8xf32>
    %43 = tpu.matmul %1, %42, %cst_31 {dimension_numbers = #tpu.dot_dimension_numbers<[1], [0], [0], [1], [0, 0, 1, 1], [], []>} : vector<8x32xf32>, vector<32x8xf32>, vector<8x8xf32> -> vector<8x8xf32>
    %c1_32 = arith.constant 1 : index
    %c0_33 = arith.constant 0 : index
    %c0_34 = arith.constant 0 : index
    %44 = vector.load %arg6[%c1_32, %c0_33, %c0_34] : memref<4x32x8xf32, #tpu.memory_space<vmem>>, vector<1x32x8xf32>
    %45 = vector.shape_cast %44 : vector<1x32x8xf32> to vector<32x8xf32>
    %cst_35 = arith.constant dense<0.000000e+00> : vector<8x8xf32>
    %46 = tpu.matmul %3, %45, %cst_35 {dimension_numbers = #tpu.dot_dimension_numbers<[1], [0], [0], [1], [0, 0, 1, 1], [], []>} : vector<8x32xf32>, vector<32x8xf32>, vector<8x8xf32> -> vector<8x8xf32>
    %c1_36 = arith.constant 1 : index
    %c0_37 = arith.constant 0 : index
    %c0_38 = arith.constant 0 : index
    %47 = vector.load %arg7[%c1_36, %c0_37, %c0_38] : memref<4x32x8xf32, #tpu.memory_space<vmem>>, vector<1x32x8xf32>
    %48 = vector.shape_cast %47 : vector<1x32x8xf32> to vector<32x8xf32>
    %cst_39 = arith.constant dense<0.000000e+00> : vector<8x8xf32>
    %49 = tpu.matmul %5, %48, %cst_39 {dimension_numbers = #tpu.dot_dimension_numbers<[1], [0], [0], [1], [0, 0, 1, 1], [], []>} : vector<8x32xf32>, vector<32x8xf32>, vector<8x8xf32> -> vector<8x8xf32>
    %cst_40 = arith.constant dense<0.000000e+00> : vector<8x8xf32>
    %50 = tpu.matmul %43, %46, %cst_40 {dimension_numbers = #tpu.dot_dimension_numbers<[1], [1], [0], [0], [0, 0, 1, 0], [], []>} : vector<8x8xf32>, vector<8x8xf32>, vector<8x8xf32> -> vector<8x8xf32>
    %cst_41 = arith.constant -1.000000e+06 : f32
    %51 = vector.broadcast %cst_41 : f32 to vector<8x8xf32>
    %52 = arith.select %10, %50, %51 : vector<8x8xi1>, vector<8x8xf32>
    %cst_42 = arith.constant dense<0xFF800000> : vector<8xf32>
    %53 = vector.multi_reduction <maximumf>, %52, %cst_42 [1] : vector<8x8xf32> to vector<8xf32>
    %54 = vector.shape_cast %53 : vector<8xf32> to vector<8x1xf32>
    %55 = vector.broadcast %54 : vector<8x1xf32> to vector<8x8xf32>
    %56 = arith.subf %52, %55 : vector<8x8xf32>
    %57 = math.exp %56 : vector<8x8xf32>
    %cst_43 = arith.constant dense<0.000000e+00> : vector<8xf32>
    %58 = vector.multi_reduction <add>, %57, %cst_43 [1] : vector<8x8xf32> to vector<8xf32>
    %59 = vector.shape_cast %58 : vector<8xf32> to vector<8x1xf32>
    %60 = tpu.reciprocal %59 {approx = true} : vector<8x1xf32> -> vector<8x1xf32>
    %61 = arith.mulf %59, %60 : vector<8x1xf32>
    %cst_44 = arith.constant 2.000000e+00 : f32
    %62 = vector.broadcast %cst_44 : f32 to vector<8x1xf32>
    %63 = arith.subf %62, %61 : vector<8x1xf32>
    %64 = arith.mulf %60, %63 : vector<8x1xf32>
    %cst_45 = arith.constant dense<0.000000e+00> : vector<8x8xf32>
    %65 = tpu.matmul %57, %49, %cst_45 {dimension_numbers = #tpu.dot_dimension_numbers<[1], [0], [0], [1], [0, 0, 1, 1], [], []>} : vector<8x8xf32>, vector<8x8xf32>, vector<8x8xf32> -> vector<8x8xf32>
    %66 = vector.broadcast %64 : vector<8x1xf32> to vector<8x8xf32>
    %67 = arith.mulf %65, %66 : vector<8x8xf32>
    %c1_46 = arith.constant 1 : index
    %c0_47 = arith.constant 0 : index
    %c0_48 = arith.constant 0 : index
    %68 = vector.load %arg8[%c1_46, %c0_47, %c0_48] : memref<4x8x128xf32, #tpu.memory_space<vmem>>, vector<1x8x128xf32>
    %69 = vector.shape_cast %68 : vector<1x8x128xf32> to vector<8x128xf32>
    %cst_49 = arith.constant dense<0.000000e+00> : vector<8x128xf32>
    %70 = tpu.matmul %67, %69, %cst_49 {dimension_numbers = #tpu.dot_dimension_numbers<[1], [0], [0], [1], [0, 0, 1, 1], [], []>} : vector<8x8xf32>, vector<8x128xf32>, vector<8x128xf32> -> vector<8x128xf32>
    %71 = arith.addf %40, %70 : vector<8x128xf32>
    %c2 = arith.constant 2 : index
    %c0_50 = arith.constant 0 : index
    %c0_51 = arith.constant 0 : index
    %72 = vector.load %arg5[%c2, %c0_50, %c0_51] : memref<4x32x8xf32, #tpu.memory_space<vmem>>, vector<1x32x8xf32>
    %73 = vector.shape_cast %72 : vector<1x32x8xf32> to vector<32x8xf32>
    %cst_52 = arith.constant dense<0.000000e+00> : vector<8x8xf32>
    %74 = tpu.matmul %1, %73, %cst_52 {dimension_numbers = #tpu.dot_dimension_numbers<[1], [0], [0], [1], [0, 0, 1, 1], [], []>} : vector<8x32xf32>, vector<32x8xf32>, vector<8x8xf32> -> vector<8x8xf32>
    %c2_53 = arith.constant 2 : index
    %c0_54 = arith.constant 0 : index
    %c0_55 = arith.constant 0 : index
    %75 = vector.load %arg6[%c2_53, %c0_54, %c0_55] : memref<4x32x8xf32, #tpu.memory_space<vmem>>, vector<1x32x8xf32>
    %76 = vector.shape_cast %75 : vector<1x32x8xf32> to vector<32x8xf32>
    %cst_56 = arith.constant dense<0.000000e+00> : vector<8x8xf32>
    %77 = tpu.matmul %3, %76, %cst_56 {dimension_numbers = #tpu.dot_dimension_numbers<[1], [0], [0], [1], [0, 0, 1, 1], [], []>} : vector<8x32xf32>, vector<32x8xf32>, vector<8x8xf32> -> vector<8x8xf32>
    %c2_57 = arith.constant 2 : index
    %c0_58 = arith.constant 0 : index
    %c0_59 = arith.constant 0 : index
    %78 = vector.load %arg7[%c2_57, %c0_58, %c0_59] : memref<4x32x8xf32, #tpu.memory_space<vmem>>, vector<1x32x8xf32>
    %79 = vector.shape_cast %78 : vector<1x32x8xf32> to vector<32x8xf32>
    %cst_60 = arith.constant dense<0.000000e+00> : vector<8x8xf32>
    %80 = tpu.matmul %5, %79, %cst_60 {dimension_numbers = #tpu.dot_dimension_numbers<[1], [0], [0], [1], [0, 0, 1, 1], [], []>} : vector<8x32xf32>, vector<32x8xf32>, vector<8x8xf32> -> vector<8x8xf32>
    %cst_61 = arith.constant dense<0.000000e+00> : vector<8x8xf32>
    %81 = tpu.matmul %74, %77, %cst_61 {dimension_numbers = #tpu.dot_dimension_numbers<[1], [1], [0], [0], [0, 0, 1, 0], [], []>} : vector<8x8xf32>, vector<8x8xf32>, vector<8x8xf32> -> vector<8x8xf32>
    %cst_62 = arith.constant -1.000000e+06 : f32
    %82 = vector.broadcast %cst_62 : f32 to vector<8x8xf32>
    %83 = arith.select %10, %81, %82 : vector<8x8xi1>, vector<8x8xf32>
    %cst_63 = arith.constant dense<0xFF800000> : vector<8xf32>
    %84 = vector.multi_reduction <maximumf>, %83, %cst_63 [1] : vector<8x8xf32> to vector<8xf32>
    %85 = vector.shape_cast %84 : vector<8xf32> to vector<8x1xf32>
    %86 = vector.broadcast %85 : vector<8x1xf32> to vector<8x8xf32>
    %87 = arith.subf %83, %86 : vector<8x8xf32>
    %88 = math.exp %87 : vector<8x8xf32>
    %cst_64 = arith.constant dense<0.000000e+00> : vector<8xf32>
    %89 = vector.multi_reduction <add>, %88, %cst_64 [1] : vector<8x8xf32> to vector<8xf32>
    %90 = vector.shape_cast %89 : vector<8xf32> to vector<8x1xf32>
    %91 = tpu.reciprocal %90 {approx = true} : vector<8x1xf32> -> vector<8x1xf32>
    %92 = arith.mulf %90, %91 : vector<8x1xf32>
    %cst_65 = arith.constant 2.000000e+00 : f32
    %93 = vector.broadcast %cst_65 : f32 to vector<8x1xf32>
    %94 = arith.subf %93, %92 : vector<8x1xf32>
    %95 = arith.mulf %91, %94 : vector<8x1xf32>
    %cst_66 = arith.constant dense<0.000000e+00> : vector<8x8xf32>
    %96 = tpu.matmul %88, %80, %cst_66 {dimension_numbers = #tpu.dot_dimension_numbers<[1], [0], [0], [1], [0, 0, 1, 1], [], []>} : vector<8x8xf32>, vector<8x8xf32>, vector<8x8xf32> -> vector<8x8xf32>
    %97 = vector.broadcast %95 : vector<8x1xf32> to vector<8x8xf32>
    %98 = arith.mulf %96, %97 : vector<8x8xf32>
    %c2_67 = arith.constant 2 : index
    %c0_68 = arith.constant 0 : index
    %c0_69 = arith.constant 0 : index
    %99 = vector.load %arg8[%c2_67, %c0_68, %c0_69] : memref<4x8x128xf32, #tpu.memory_space<vmem>>, vector<1x8x128xf32>
    %100 = vector.shape_cast %99 : vector<1x8x128xf32> to vector<8x128xf32>
    %cst_70 = arith.constant dense<0.000000e+00> : vector<8x128xf32>
    %101 = tpu.matmul %98, %100, %cst_70 {dimension_numbers = #tpu.dot_dimension_numbers<[1], [0], [0], [1], [0, 0, 1, 1], [], []>} : vector<8x8xf32>, vector<8x128xf32>, vector<8x128xf32> -> vector<8x128xf32>
    %102 = arith.addf %71, %101 : vector<8x128xf32>
    %c3 = arith.constant 3 : index
    %c0_71 = arith.constant 0 : index
    %c0_72 = arith.constant 0 : index
    %103 = vector.load %arg5[%c3, %c0_71, %c0_72] : memref<4x32x8xf32, #tpu.memory_space<vmem>>, vector<1x32x8xf32>
    %104 = vector.shape_cast %103 : vector<1x32x8xf32> to vector<32x8xf32>
    %cst_73 = arith.constant dense<0.000000e+00> : vector<8x8xf32>
    %105 = tpu.matmul %1, %104, %cst_73 {dimension_numbers = #tpu.dot_dimension_numbers<[1], [0], [0], [1], [0, 0, 1, 1], [], []>} : vector<8x32xf32>, vector<32x8xf32>, vector<8x8xf32> -> vector<8x8xf32>
    %c3_74 = arith.constant 3 : index
    %c0_75 = arith.constant 0 : index
    %c0_76 = arith.constant 0 : index
    %106 = vector.load %arg6[%c3_74, %c0_75, %c0_76] : memref<4x32x8xf32, #tpu.memory_space<vmem>>, vector<1x32x8xf32>
    %107 = vector.shape_cast %106 : vector<1x32x8xf32> to vector<32x8xf32>
    %cst_77 = arith.constant dense<0.000000e+00> : vector<8x8xf32>
    %108 = tpu.matmul %3, %107, %cst_77 {dimension_numbers = #tpu.dot_dimension_numbers<[1], [0], [0], [1], [0, 0, 1, 1], [], []>} : vector<8x32xf32>, vector<32x8xf32>, vector<8x8xf32> -> vector<8x8xf32>
    %c3_78 = arith.constant 3 : index
    %c0_79 = arith.constant 0 : index
    %c0_80 = arith.constant 0 : index
    %109 = vector.load %arg7[%c3_78, %c0_79, %c0_80] : memref<4x32x8xf32, #tpu.memory_space<vmem>>, vector<1x32x8xf32>
    %110 = vector.shape_cast %109 : vector<1x32x8xf32> to vector<32x8xf32>
    %cst_81 = arith.constant dense<0.000000e+00> : vector<8x8xf32>
    %111 = tpu.matmul %5, %110, %cst_81 {dimension_numbers = #tpu.dot_dimension_numbers<[1], [0], [0], [1], [0, 0, 1, 1], [], []>} : vector<8x32xf32>, vector<32x8xf32>, vector<8x8xf32> -> vector<8x8xf32>
    %cst_82 = arith.constant dense<0.000000e+00> : vector<8x8xf32>
    %112 = tpu.matmul %105, %108, %cst_82 {dimension_numbers = #tpu.dot_dimension_numbers<[1], [1], [0], [0], [0, 0, 1, 0], [], []>} : vector<8x8xf32>, vector<8x8xf32>, vector<8x8xf32> -> vector<8x8xf32>
    %cst_83 = arith.constant -1.000000e+06 : f32
    %113 = vector.broadcast %cst_83 : f32 to vector<8x8xf32>
    %114 = arith.select %10, %112, %113 : vector<8x8xi1>, vector<8x8xf32>
    %cst_84 = arith.constant dense<0xFF800000> : vector<8xf32>
    %115 = vector.multi_reduction <maximumf>, %114, %cst_84 [1] : vector<8x8xf32> to vector<8xf32>
    %116 = vector.shape_cast %115 : vector<8xf32> to vector<8x1xf32>
    %117 = vector.broadcast %116 : vector<8x1xf32> to vector<8x8xf32>
    %118 = arith.subf %114, %117 : vector<8x8xf32>
    %119 = math.exp %118 : vector<8x8xf32>
    %cst_85 = arith.constant dense<0.000000e+00> : vector<8xf32>
    %120 = vector.multi_reduction <add>, %119, %cst_85 [1] : vector<8x8xf32> to vector<8xf32>
    %121 = vector.shape_cast %120 : vector<8xf32> to vector<8x1xf32>
    %122 = tpu.reciprocal %121 {approx = true} : vector<8x1xf32> -> vector<8x1xf32>
    %123 = arith.mulf %121, %122 : vector<8x1xf32>
    %cst_86 = arith.constant 2.000000e+00 : f32
    %124 = vector.broadcast %cst_86 : f32 to vector<8x1xf32>
    %125 = arith.subf %124, %123 : vector<8x1xf32>
    %126 = arith.mulf %122, %125 : vector<8x1xf32>
    %cst_87 = arith.constant dense<0.000000e+00> : vector<8x8xf32>
    %127 = tpu.matmul %119, %111, %cst_87 {dimension_numbers = #tpu.dot_dimension_numbers<[1], [0], [0], [1], [0, 0, 1, 1], [], []>} : vector<8x8xf32>, vector<8x8xf32>, vector<8x8xf32> -> vector<8x8xf32>
    %128 = vector.broadcast %126 : vector<8x1xf32> to vector<8x8xf32>
    %129 = arith.mulf %127, %128 : vector<8x8xf32>
    %c3_88 = arith.constant 3 : index
    %c0_89 = arith.constant 0 : index
    %c0_90 = arith.constant 0 : index
    %130 = vector.load %arg8[%c3_88, %c0_89, %c0_90] : memref<4x8x128xf32, #tpu.memory_space<vmem>>, vector<1x8x128xf32>
    %131 = vector.shape_cast %130 : vector<1x8x128xf32> to vector<8x128xf32>
    %cst_91 = arith.constant dense<0.000000e+00> : vector<8x128xf32>
    %132 = tpu.matmul %129, %131, %cst_91 {dimension_numbers = #tpu.dot_dimension_numbers<[1], [0], [0], [1], [0, 0, 1, 1], [], []>} : vector<8x8xf32>, vector<8x128xf32>, vector<8x128xf32> -> vector<8x128xf32>
    %133 = arith.addf %102, %132 : vector<8x128xf32>
    %c0_92 = arith.constant 0 : index
    %c0_93 = arith.constant 0 : index
    %c0_94 = arith.constant 0 : index
    %134 = vector.load %arg9[%c0_92, %c0_93, %c0_94] : memref<1x8x128xf32, #tpu.memory_space<vmem>>, vector<1x8x128xf32>
    %135 = vector.shape_cast %134 : vector<1x8x128xf32> to vector<8x128xf32>
    %136 = vector.shape_cast %133 : vector<8x128xf32> to vector<1x8x128xf32>
    tpu.vector_store %arg9[%c0_92, %c0_93, %c0_94], %136 {strides = array<i32>} : memref<1x8x128xf32, #tpu.memory_space<vmem>>, vector<1x8x128xf32>,
    return
  }
  func.func @transform_0(%arg0: i32, %arg1: memref<2xi32, #tpu.memory_space<smem>>) -> (i32, i32, i32) {
    %c0_i32 = arith.constant 0 : i32
    %c0_i32_0 = arith.constant 0 : i32
    %c0_i32_1 = arith.constant 0 : i32
    return %arg0, %c0_i32, %c0_i32_0 : i32, i32, i32
  }
  func.func @transform_1(%arg0: i32, %arg1: memref<2xi32, #tpu.memory_space<smem>>) -> (i32, i32, i32) {
    %c0_i32 = arith.constant 0 : i32
    %c0_i32_0 = arith.constant 0 : i32
    %c0_i32_1 = arith.constant 0 : i32
    return %arg0, %c0_i32, %c0_i32_0 : i32, i32, i32
  }
  func.func @transform_2(%arg0: i32, %arg1: memref<2xi32, #tpu.memory_space<smem>>) -> (i32, i32, i32) {
    %c0_i32 = arith.constant 0 : i32
    %c0_i32_0 = arith.constant 0 : i32
    %c0_i32_1 = arith.constant 0 : i32
    return %arg0, %c0_i32, %c0_i32_0 : i32, i32, i32
  }
  func.func @transform_3(%arg0: i32, %arg1: memref<2xi32, #tpu.memory_space<smem>>) -> (i32, i32, i32) {
    %c0_i32 = arith.constant 0 : i32
    %c0_i32_0 = arith.constant 0 : i32
    %c0_i32_1 = arith.constant 0 : i32
    %c0_i32_2 = arith.constant 0 : i32
    return %c0_i32, %c0_i32_0, %c0_i32_1 : i32, i32, i32
  }
  func.func @transform_4(%arg0: i32, %arg1: memref<2xi32, #tpu.memory_space<smem>>) -> (i32, i32, i32) {
    %c0_i32 = arith.constant 0 : i32
    %c0_i32_0 = arith.constant 0 : i32
    %c0_i32_1 = arith.constant 0 : i32
    %c0_i32_2 = arith.constant 0 : i32
    return %c0_i32, %c0_i32_0, %c0_i32_1 : i32, i32, i32
  }
  func.func @transform_5(%arg0: i32, %arg1: memref<2xi32, #tpu.memory_space<smem>>) -> (i32, i32, i32) {
    %c0_i32 = arith.constant 0 : i32
    %c0_i32_0 = arith.constant 0 : i32
    %c0_i32_1 = arith.constant 0 : i32
    %c0_i32_2 = arith.constant 0 : i32
    return %c0_i32, %c0_i32_0, %c0_i32_1 : i32, i32, i32
  }
  func.func @transform_6(%arg0: i32, %arg1: memref<2xi32, #tpu.memory_space<smem>>) -> (i32, i32, i32) {
    %c0_i32 = arith.constant 0 : i32
    %c0_i32_0 = arith.constant 0 : i32
    %c0_i32_1 = arith.constant 0 : i32
    %c0_i32_2 = arith.constant 0 : i32
    return %c0_i32, %c0_i32_0, %c0_i32_1 : i32, i32, i32
  }
  func.func @transform_7(%arg0: i32, %arg1: memref<2xi32, #tpu.memory_space<smem>>) -> (i32, i32, i32) {
    %c0_i32 = arith.constant 0 : i32
    %c0_i32_0 = arith.constant 0 : i32
    %c0_i32_1 = arith.constant 0 : i32
    return %arg0, %c0_i32, %c0_i32_0 : i32, i32, i32
  }
}

</mosaic_0001>

<llo_original>
// kernel: tpu_custom_call.1
$region0: #{tpu_custom_call.1}
  #allocation0 [shape = 'u32[]', space=smem, size = 0x4, offset = 0x4, fixed_abs, tag = 'smem constant byte address 0x4 - core index']
  #allocation1 [shape = 'u32[144,128]{1,0:T(1,128)}', space=vmem, size = 0x12000, scoped, tag = 'internal scratch']
  #allocation2 [shape = 's32[1]{0}', space=sflag, size = 0x4, scoped, tag = 'scoped memory for tpu_custom_call.1']
  #allocation3 [shape = 'u8[512]{0}', space=smem, size = 0x200, scoped, tag = 'prefetched SMEM operand 0']
  %s0 = inlined_call_operand.vmem [shape: s32[2], index: 0, kind: input, shape index: {}]
  %s1 = inlined_call_operand.vmem [shape: f32[2,8,32], index: 1, kind: input, shape index: {}]
  %s2 = inlined_call_operand.vmem [shape: f32[2,8,32], index: 2, kind: input, shape index: {}]
  %s3 = inlined_call_operand.vmem [shape: f32[2,8,32], index: 3, kind: input, shape index: {}]
  %s4 = inlined_call_operand.vmem [shape: f32[4,32,8], index: 4, kind: input, shape index: {}]
  %s5 = inlined_call_operand.vmem [shape: f32[4,32,8], index: 5, kind: input, shape index: {}]
  %s6 = inlined_call_operand.vmem [shape: f32[4,32,8], index: 6, kind: input, shape index: {}]
  %s7 = inlined_call_operand.vmem [shape: f32[4,8,128], index: 7, kind: input, shape index: {}]
  %s8 = inlined_call_operand.hbm [shape: f32[2,8,128], index: 8, kind: output, shape index: {}]
  %s9 = sld [smem:[#allocation0]]
  $region61: #{tpu_custom_call.1} parent=0
    _
  %s11 = ssub.s32 1, %s9
  %s12 = scalar_select 0, %s11, %s9
  %s13 = sshll.u32 %s0, 4
  %s14 = int_to_ptr.vmem [resolvable:$true] %s13
  %16 = dma.vmem_to_smem %s14, 16, [#allocation3], [#allocation2]
  %17 = dma.done [#allocation2], 16
  %18 = sfence
  $region1: #{tpu_custom_call.1} parent=0
    #allocation4 [shape = 'u8[8192]{0}', space=vmem, size = 0x2000, scoped, tag = 'output window, operand 0']
    #allocation5 [shape = 's32[2]{0}', space=sflag, size = 0x8, scoped, tag = 'scoped memory for tpu_custom_call.1']
    %19 = vsyncpa [#allocation5], 0
    %s20 = scalar_lea.sflag [#allocation5], 1
    %21 = vsyncpa %s20, 0
    loop: start=0, step=1, limit=4
    $region2: #{tpu_custom_call.1} parent=1 // loop_pre_header
      _
    $region3: #{tpu_custom_call.1} parent=1 // loop_header
      %s23 = sphi 0, %s27
      %p24 = scmp.ge.s32.totalorder %s23, 4
      %s33 = sphi 0, %s35
      %s36 = sphi 0, %s33
      %s37 = sphi 0, %s36
      %s53 = sphi 0, %s37
      %s59 = sphi 0, %s61
      %s62 = sphi 0, %s59
      %s63 = sphi 0, %s62
      %s79 = sphi 0, %s63
      %s85 = sphi 0, %s87
      %s88 = sphi 0, %s85
      %s89 = sphi 0, %s88
      %s105 = sphi 0, %s89
      %s109 = sphi 0, %s109
      %s111 = sphi 0, %s109
      %s112 = sphi 0, %s111
      %s126 = sphi 0, %s112
      %s130 = sphi 0, %s130
      %s132 = sphi 0, %s130
      %s133 = sphi 0, %s132
      %s147 = sphi 0, %s133
      %s151 = sphi 0, %s151
      %s153 = sphi 0, %s151
      %s154 = sphi 0, %s153
      %s168 = sphi 0, %s154
      %s172 = sphi 0, %s172
      %s174 = sphi 0, %s172
      %s175 = sphi 0, %s174
      %s189 = sphi 0, %s175
      %s195 = sphi 0, %s197
      %s198 = sphi 0, %s195
      %s199 = sphi 0, %s198
      %s215 = sphi 0, %s199
    $region4: #{tpu_custom_call.1} parent=1 // loop_header_branch
      %26 = sbr.rel (%p24) target = $region8
    $region5: #{tpu_custom_call.1} parent=1 // loop_body
      %s28 = ssub.s32 %s23, 1
      %s29 = ssub.s32 %s23, 2
      %s30 = sadd.s32 %s23, 1
      %s31 = ssub.s32 %s23, %s30
      %p32 = scmp.eq.s32.totalorder %s31, 0
      %s34 = sadd.s32 %s33, 1
      %s35 = scalar_select %p32, %s33, %s34
      %p38 = pneg %p32
      %p39 = scmp.eq.s32.totalorder %s23, 1
      %p40 = por %p38, %p39
      %p41 = scmp.ne.s32.totalorder %s33, %s36
      %p42 = scmp.eq.s32.totalorder %s23, 0
      %p43 = por %p41, %p42
      %p44 = scmp.ne.s32.totalorder %s33, %s36
      %p45 = scmp.eq.s32.totalorder %s28, 1
      %p46 = por %p44, %p45
      %p47 = scmp.ne.s32.totalorder %s36, %s37
      %p48 = scmp.eq.s32.totalorder %s28, 0
      %p49 = por %p47, %p48
      %p50 = scmp.ne.s32.totalorder %s36, %s37
      %p51 = scmp.eq.s32.totalorder %s29, 1
      %p52 = por %p50, %p51
      %p54 = scmp.ne.s32.totalorder %s37, %s53
      %p55 = scmp.eq.s32.totalorder %s29, 0
      %p56 = por %p54, %p55
      %s57 = ssub.s32 %s23, %s30
      %p58 = scmp.eq.s32.totalorder %s57, 0
      %s60 = sadd.s32 %s59, 1
      %s61 = scalar_select %p58, %s59, %s60
      %p64 = pneg %p58
      %p65 = scmp.eq.s32.totalorder %s23, 1
      %p66 = por %p64, %p65
      %p67 = scmp.ne.s32.totalorder %s59, %s62
      %p68 = scmp.eq.s32.totalorder %s23, 0
      %p69 = por %p67, %p68
      %p70 = scmp.ne.s32.totalorder %s59, %s62
      %p71 = scmp.eq.s32.totalorder %s28, 1
      %p72 = por %p70, %p71
      %p73 = scmp.ne.s32.totalorder %s62, %s63
      %p74 = scmp.eq.s32.totalorder %s28, 0
      %p75 = por %p73, %p74
      %p76 = scmp.ne.s32.totalorder %s62, %s63
      %p77 = scmp.eq.s32.totalorder %s29, 1
      %p78 = por %p76, %p77
      %p80 = scmp.ne.s32.totalorder %s63, %s79
      %p81 = scmp.eq.s32.totalorder %s29, 0
      %p82 = por %p80, %p81
      %s83 = ssub.s32 %s23, %s30
      %p84 = scmp.eq.s32.totalorder %s83, 0
      %s86 = sadd.s32 %s85, 1
      %s87 = scalar_select %p84, %s85, %s86
      %p90 = pneg %p84
      %p91 = scmp.eq.s32.totalorder %s23, 1
      %p92 = por %p90, %p91
      %p93 = scmp.ne.s32.totalorder %s85, %s88
      %p94 = scmp.eq.s32.totalorder %s23, 0
      %p95 = por %p93, %p94
      %p96 = scmp.ne.s32.totalorder %s85, %s88
      %p97 = scmp.eq.s32.totalorder %s28, 1
      %p98 = por %p96, %p97
      %p99 = scmp.ne.s32.totalorder %s88, %s89
      %p100 = scmp.eq.s32.totalorder %s28, 0
      %p101 = por %p99, %p100
      %p102 = scmp.ne.s32.totalorder %s88, %s89
      %p103 = scmp.eq.s32.totalorder %s29, 1
      %p104 = por %p102, %p103
      %p106 = scmp.ne.s32.totalorder %s89, %s105
      %p107 = scmp.eq.s32.totalorder %s29, 0
      %p108 = por %p106, %p107
      %s110 = sadd.s32 %s109, 1
      %p113 = scmp.eq.s32.totalorder %s23, 1
      %p114 = scmp.ne.s32.totalorder %s109, %s111
      %p115 = scmp.eq.s32.totalorder %s23, 0
      %p116 = por %p114, %p115
      %p117 = scmp.ne.s32.totalorder %s109, %s111
      %p118 = scmp.eq.s32.totalorder %s28, 1
      %p119 = por %p117, %p118
      %p120 = scmp.ne.s32.totalorder %s111, %s112
      %p121 = scmp.eq.s32.totalorder %s28, 0
      %p122 = por %p120, %p121
      %p123 = scmp.ne.s32.totalorder %s111, %s112
      %p124 = scmp.eq.s32.totalorder %s29, 1
      %p125 = por %p123, %p124
      %p127 = scmp.ne.s32.totalorder %s112, %s126
      %p128 = scmp.eq.s32.totalorder %s29, 0
      %p129 = por %p127, %p128
      %s131 = sadd.s32 %s130, 1
      %p134 = scmp.eq.s32.totalorder %s23, 1
      %p135 = scmp.ne.s32.totalorder %s130, %s132
      %p136 = scmp.eq.s32.totalorder %s23, 0
      %p137 = por %p135, %p136
      %p138 = scmp.ne.s32.totalorder %s130, %s132
      %p139 = scmp.eq.s32.totalorder %s28, 1
      %p140 = por %p138, %p139
      %p141 = scmp.ne.s32.totalorder %s132, %s133
      %p142 = scmp.eq.s32.totalorder %s28, 0
      %p143 = por %p141, %p142
      %p144 = scmp.ne.s32.totalorder %s132, %s133
      %p145 = scmp.eq.s32.totalorder %s29, 1
      %p146 = por %p144, %p145
      %p148 = scmp.ne.s32.totalorder %s133, %s147
      %p149 = scmp.eq.s32.totalorder %s29, 0
      %p150 = por %p148, %p149
      %s152 = sadd.s32 %s151, 1
      %p155 = scmp.eq.s32.totalorder %s23, 1
      %p156 = scmp.ne.s32.totalorder %s151, %s153
      %p157 = scmp.eq.s32.totalorder %s23, 0
      %p158 = por %p156, %p157
      %p159 = scmp.ne.s32.totalorder %s151, %s153
      %p160 = scmp.eq.s32.totalorder %s28, 1
      %p161 = por %p159, %p160
      %p162 = scmp.ne.s32.totalorder %s153, %s154
      %p163 = scmp.eq.s32.totalorder %s28, 0
      %p164 = por %p162, %p163
      %p165 = scmp.ne.s32.totalorder %s153, %s154
      %p166 = scmp.eq.s32.totalorder %s29, 1
      %p167 = por %p165, %p166
      %p169 = scmp.ne.s32.totalorder %s154, %s168
      %p170 = scmp.eq.s32.totalorder %s29, 0
      %p171 = por %p169, %p170
      %s173 = sadd.s32 %s172, 1
      %p176 = scmp.eq.s32.totalorder %s23, 1
      %p177 = scmp.ne.s32.totalorder %s172, %s174
      %p178 = scmp.eq.s32.totalorder %s23, 0
      %p179 = por %p177, %p178
      %p180 = scmp.ne.s32.totalorder %s172, %s174
      %p181 = scmp.eq.s32.totalorder %s28, 1
      %p182 = por %p180, %p181
      %p183 = scmp.ne.s32.totalorder %s174, %s175
      %p184 = scmp.eq.s32.totalorder %s28, 0
      %p185 = por %p183, %p184
      %p186 = scmp.ne.s32.totalorder %s174, %s175
      %p187 = scmp.eq.s32.totalorder %s29, 1
      %p188 = por %p186, %p187
      %p190 = scmp.ne.s32.totalorder %s175, %s189
      %p191 = scmp.eq.s32.totalorder %s29, 0
      %p192 = por %p190, %p191
      %s193 = ssub.s32 %s23, %s30
      %p194 = scmp.eq.s32.totalorder %s193, 0
      %s196 = sadd.s32 %s195, 1
      %s197 = scalar_select %p194, %s195, %s196
      %p200 = pneg %p194
      %p201 = scmp.eq.s32.totalorder %s23, 1
      %p202 = por %p200, %p201
      %p203 = scmp.ne.s32.totalorder %s195, %s198
      %p204 = scmp.eq.s32.totalorder %s23, 0
      %p205 = por %p203, %p204
      %p206 = scmp.ne.s32.totalorder %s195, %s198
      %p207 = scmp.eq.s32.totalorder %s28, 1
      %p208 = por %p206, %p207
      %p209 = scmp.ne.s32.totalorder %s198, %s199
      %p210 = scmp.eq.s32.totalorder %s28, 0
      %p211 = por %p209, %p210
      %p212 = scmp.ne.s32.totalorder %s198, %s199
      %p213 = scmp.eq.s32.totalorder %s29, 1
      %p214 = por %p212, %p213
      %p216 = scmp.ne.s32.totalorder %s199, %s215
      %p217 = scmp.eq.s32.totalorder %s29, 0
      %p218 = por %p216, %p217
      %p219 = scmp.le.s32.totalorder 1, %s23
      %p220 = scmp.lt.s32.totalorder %s23, 3
      %p221 = pnand %p219, %p220
      %p222 = pneg %p221
      // Predicated region
      $region9: #{tpu_custom_call.1} parent=5 // pred_check
        _
      $region10: #{tpu_custom_call.1} parent=5 // pred_check_branch
        %224 = sbr.rel (%p221) target = $region12
      $region11: #{tpu_custom_call.1} parent=5 // pred_region
        %s225 = ssub.s32 %s23, 1
        // Predicated region
        $region13: #{tpu_custom_call.1} parent=11 // pred_check
          %p226 = pneg %p122
        $region14: #{tpu_custom_call.1} parent=11 // pred_check_branch
          %228 = sbr.rel (%p226) target = $region16
        $region15: #{tpu_custom_call.1} parent=11 // pred_region
          _
        $region16: #{tpu_custom_call.1} parent=11 // pred_fallthru
          _
        // Predicated region
        $region17: #{tpu_custom_call.1} parent=11 // pred_check
          %p229 = pneg %p143
        $region18: #{tpu_custom_call.1} parent=11 // pred_check_branch
          %231 = sbr.rel (%p229) target = $region20
        $region19: #{tpu_custom_call.1} parent=11 // pred_region
          _
        $region20: #{tpu_custom_call.1} parent=11 // pred_fallthru
          _
        // Predicated region
        $region21: #{tpu_custom_call.1} parent=11 // pred_check
          %p232 = pneg %p164
        $region22: #{tpu_custom_call.1} parent=11 // pred_check_branch
          %234 = sbr.rel (%p232) target = $region24
        $region23: #{tpu_custom_call.1} parent=11 // pred_region
          _
        $region24: #{tpu_custom_call.1} parent=11 // pred_fallthru
          _
        // Predicated region
        $region25: #{tpu_custom_call.1} parent=11 // pred_check
          %p235 = pneg %p185
        $region26: #{tpu_custom_call.1} parent=11 // pred_check_branch
          %237 = sbr.rel (%p235) target = $region28
        $region27: #{tpu_custom_call.1} parent=11 // pred_region
          _
        $region28: #{tpu_custom_call.1} parent=11 // pred_fallthru
          _
      $region12: #{tpu_custom_call.1} parent=5 // pred_fallthru
        _
      %p238 = scmp.lt.s32.totalorder %s23, 2
      // Predicated region
      $region29: #{tpu_custom_call.1} parent=5 // pred_check
        %p239 = pneg %p238
      $region30: #{tpu_custom_call.1} parent=5 // pred_check_branch
        %241 = sbr.rel (%p239) target = $region32
      $region31: #{tpu_custom_call.1} parent=5 // pred_region
        // Predicated region
        $region33: #{tpu_custom_call.1} parent=31 // pred_check
          %p242 = pneg %p43
        $region34: #{tpu_custom_call.1} parent=31 // pred_check_branch
          %244 = sbr.rel (%p242) target = $region36
        $region35: #{tpu_custom_call.1} parent=31 // pred_region
          %p245 = scmp.lt.s32.totalorder %s23, 1
          %s246 = scalar_select %p245, %s23, 1
          %s247 = smul.addr %s246, 8
          %s248 = scalar_lea.vmem %s1, %s247
        $region36: #{tpu_custom_call.1} parent=31 // pred_fallthru
          _
        // Predicated region
        $region37: #{tpu_custom_call.1} parent=31 // pred_check
          %p249 = pneg %p69
        $region38: #{tpu_custom_call.1} parent=31 // pred_check_branch
          %251 = sbr.rel (%p249) target = $region40
        $region39: #{tpu_custom_call.1} parent=31 // pred_region
          %p252 = scmp.lt.s32.totalorder %s23, 1
          %s253 = scalar_select %p252, %s23, 1
          %s254 = smul.addr %s253, 8
          %s255 = scalar_lea.vmem %s2, %s254
        $region40: #{tpu_custom_call.1} parent=31 // pred_fallthru
          _
        // Predicated region
        $region41: #{tpu_custom_call.1} parent=31 // pred_check
          %p256 = pneg %p95
        $region42: #{tpu_custom_call.1} parent=31 // pred_check_branch
          %258 = sbr.rel (%p256) target = $region44
        $region43: #{tpu_custom_call.1} parent=31 // pred_region
          %p259 = scmp.lt.s32.totalorder %s23, 1
          %s260 = scalar_select %p259, %s23, 1
          %s261 = smul.addr %s260, 8
          %s262 = scalar_lea.vmem %s3, %s261
        $region44: #{tpu_custom_call.1} parent=31 // pred_fallthru
          _
      $region32: #{tpu_custom_call.1} parent=5 // pred_fallthru
        _
      %p263 = scmp.le.s32.totalorder 1, %s23
      %p264 = scmp.lt.s32.totalorder %s23, 3
      %p265 = pnand %p263, %p264
      %p266 = pneg %p265
      // Predicated region
      $region45: #{tpu_custom_call.1} parent=5 // pred_check
        _
      $region46: #{tpu_custom_call.1} parent=5 // pred_check_branch
        %268 = sbr.rel (%p265) target = $region48
      $region47: #{tpu_custom_call.1} parent=5 // pred_region
        %s269 = ssub.s32 %s23, 1
        %p270 = scmp.lt.s32.totalorder %s28, 1
        %s271 = scalar_select %p270, %s28, 1
        %s272 = smul.addr %s271, 8
        %s273 = scalar_lea.vmem %s1, %s272
        %p274 = pneg %p49
        %p275 = pneg %p46
        %p276 = scmp.lt.s32.totalorder %s28, 1
        %s277 = scalar_select %p276, %s28, 1
        %s278 = smul.addr %s277, 8
        %s279 = scalar_lea.vmem %s2, %s278
        %p280 = pneg %p75
        %p281 = pneg %p72
        %p282 = scmp.lt.s32.totalorder %s28, 1
        %s283 = scalar_select %p282, %s28, 1
        %s284 = smul.addr %s283, 8
        %s285 = scalar_lea.vmem %s3, %s284
        %p286 = pneg %p101
        %p287 = pneg %p98
        %p288 = pneg %p122
        %p289 = pneg %p119
        %p290 = pneg %p143
        %p291 = pneg %p140
        %p292 = pneg %p164
        %p293 = pneg %p161
        %p294 = pneg %p185
        %p295 = pneg %p182
        %p296 = pneg %p211
        %p297 = pneg %p208
        %s298 = sand.u32 %s198, 1
        %s299 = scalar_lea.sflag [#allocation5], %s298
        %s300 = sand.u32 %s198, 1
        %s301 = smul.addr %s300, 8
        %s302 = scalar_lea.vmem [#allocation4], %s301
        %p303 = scmp.lt.s32.totalorder %s28, 1
        %s304 = scalar_select %p303, %s28, 1
        %s305 = smul.addr %s304, 8
        %s306 = scalar_lea.vmem %s1, %s305
        %p307 = scmp.lt.s32.totalorder %s28, 1
        %s308 = scalar_select %p307, %s28, 1
        %s309 = smul.addr %s308, 8
        %s310 = scalar_lea.vmem %s2, %s309
        %p311 = scmp.lt.s32.totalorder %s28, 1
        %s312 = scalar_select %p311, %s28, 1
        %s313 = smul.addr %s312, 8
        %s314 = scalar_lea.vmem %s3, %s313
        %v315 = vld [vmem:[%s306] sm:$0xff]
        %v316 = vld [vmem:[%s310] sm:$0xff]
        %v317 = vld [vmem:[%s314] sm:$0xff]
        %s318 = sld [smem:[#allocation3 + %s28]]
        %v319 = vlaneseq
        %v320 = vand.u32 %v319, 127
        %v321 = vstv %s318
        %vm322 = vcmp.lt.s32.totalorder %v320, %v321
        %v323 = vld [vmem:[%s4] sm:$0xff]
        %v324 = vld [vmem:[%s4 + $0x8] sm:$0xff]
        %v325 = vld [vmem:[%s4 + $0x10] sm:$0xff]
        %v326 = vld [vmem:[%s4 + $0x18] sm:$0xff]
        %vm327 = vcmask 261120
        %v329 = vsel %vm327, %v315, 0
        %331 = vmatprep.subr.mxu0 0.0
        %332 = vmatpush1.msra.mxu0 %v323
        %333 = vmatprep.subr.mxu0 0.0
        %334 = vmatpush1.msra.mxu0 %v324
        %335 = vmatprep.subr.mxu0 0.0
        %336 = vmatpush1.msra.mxu0 %v325
        %337 = vmatprep.subr.mxu0 0.0
        %338 = vmatpush1.msra.mxu0 %v326
        %339 = vmatprep.subr.mxu0 0.0
        %340 = vmatpush1.msra.mxu0 0.0
        %341 = vmatprep.subr.mxu0 0.0
        %342 = vmatpush1.msra.mxu0 0.0
        %343 = vmatprep.subr.mxu0 0.0
        %344 = vmatpush1.msra.mxu0 0.0
        %345 = vmatprep.subr.mxu0 0.0
        %346 = vmatpush1.msra.mxu0 0.0
        %347 = vmatprep.subr.mxu0 0.0
        %348 = vmatpush1.msra.mxu0 0.0
        %349 = vmatprep.subr.mxu0 0.0
        %350 = vmatpush1.msra.mxu0 0.0
        %351 = vmatprep.subr.mxu0 0.0
        %352 = vmatpush1.msra.mxu0 0.0
        %353 = vmatprep.subr.mxu0 0.0
        %354 = vmatpush1.msra.mxu0 0.0
        %355 = vmatprep.subr.mxu0 0.0
        %356 = vmatpush1.msra.mxu0 0.0
        %357 = vmatprep.subr.mxu0 0.0
        %358 = vmatpush1.msra.mxu0 0.0
        %359 = vmatprep.subr.mxu0 0.0
        %360 = vmatpush1.msra.mxu0 0.0
        %361 = vmatprep.subr.mxu0 0.0
        %362 = vmatpush1.msra.mxu0 0.0
        %363 = vmatprep.subr.mxu0 0.0
        %364 = vmatpush1.msra.mxu0 0.0
        %365 = vmatprep.subr.mxu0 0.0
        %366 = vmatpush1.msra.mxu0 0.0
        %367 = vmatprep.subr.mxu0 0.0
        %368 = vmatpush1.msra.mxu0 0.0
        %369 = vmatprep.subr.mxu0 0.0
        %370 = vmatpush1.msra.mxu0 0.0
        %371 = vmatprep.subr.mxu0 0.0
        %372 = vmatpush1.msra.mxu0 0.0
        %373 = vmatprep.subr.mxu0 0.0
        %374 = vmatpush1.msra.mxu0 0.0
        %375 = vmatprep.subr.mxu0 0.0
        %376 = vmatpush1.msra.mxu0 0.0
        %377 = vmatprep.subr.mxu0 0.0
        %378 = vmatpush1.msra.mxu0 0.0
        %379 = vmatprep.subr.mxu0 0.0
        %380 = vmatpush1.msra.mxu0 0.0
        %381 = vmatprep.subr.mxu0 0.0
        %382 = vmatpush1.msra.mxu0 0.0
        %383 = vmatprep.subr.mxu0 0.0
        %384 = vmatpush1.msra.mxu0 0.0
        %385 = vmatprep.subr.mxu0 0.0
        %386 = vmatpush1.msra.mxu0 0.0
        %387 = vmatprep.subr.mxu0 0.0
        %388 = vmatpush1.msra.mxu0 0.0
        %389 = vmatprep.subr.mxu0 0.0
        %390 = vmatpush1.msra.mxu0 0.0
        %391 = vmatprep.subr.mxu0 0.0
        %392 = vmatpush1.msra.mxu0 0.0
        %393 = vmatprep.subr.mxu0 0.0
        %394 = vmatpush1.msra.mxu0 0.0
        %395 = vmatprep.mubr.f32.mxu0 0.0
        %396 = vmatmul.mubr.f32.gmra.mrb[0].mxu0 %v329
        %v397 = vpop.f32.mrb[0].mxu0
        %v398 = vadd.f32 0.0, %v397
        %v399 = vpop.f32.mrb[0].mxu0
        %400 = vdwg.mxu0
        %v401 = vld [vmem:[%s5] sm:$0xff]
        %v402 = vld [vmem:[%s5 + $0x8] sm:$0xff]
        %v403 = vld [vmem:[%s5 + $0x10] sm:$0xff]
        %v404 = vld [vmem:[%s5 + $0x18] sm:$0xff]
        %v406 = vsel %vm327, %v316, 0
        %408 = vmatprep.subr.mxu0 0.0
        %409 = vmatpush1.msra.mxu0 %v401
        %410 = vmatprep.subr.mxu0 0.0
        %411 = vmatpush1.msra.mxu0 %v402
        %412 = vmatprep.subr.mxu0 0.0
        %413 = vmatpush1.msra.mxu0 %v403
        %414 = vmatprep.subr.mxu0 0.0
        %415 = vmatpush1.msra.mxu0 %v404
        %416 = vmatprep.subr.mxu0 0.0
        %417 = vmatpush1.msra.mxu0 0.0
        %418 = vmatprep.subr.mxu0 0.0
        %419 = vmatpush1.msra.mxu0 0.0
        %420 = vmatprep.subr.mxu0 0.0
        %421 = vmatpush1.msra.mxu0 0.0
        %422 = vmatprep.subr.mxu0 0.0
        %423 = vmatpush1.msra.mxu0 0.0
        %424 = vmatprep.subr.mxu0 0.0
        %425 = vmatpush1.msra.mxu0 0.0
        %426 = vmatprep.subr.mxu0 0.0
        %427 = vmatpush1.msra.mxu0 0.0
        %428 = vmatprep.subr.mxu0 0.0
        %429 = vmatpush1.msra.mxu0 0.0
        %430 = vmatprep.subr.mxu0 0.0
        %431 = vmatpush1.msra.mxu0 0.0
        %432 = vmatprep.subr.mxu0 0.0
        %433 = vmatpush1.msra.mxu0 0.0
        %434 = vmatprep.subr.mxu0 0.0
        %435 = vmatpush1.msra.mxu0 0.0
        %436 = vmatprep.subr.mxu0 0.0
        %437 = vmatpush1.msra.mxu0 0.0
        %438 = vmatprep.subr.mxu0 0.0
        %439 = vmatpush1.msra.mxu0 0.0
        %440 = vmatprep.subr.mxu0 0.0
        %441 = vmatpush1.msra.mxu0 0.0
        %442 = vmatprep.subr.mxu0 0.0
        %443 = vmatpush1.msra.mxu0 0.0
        %444 = vmatprep.subr.mxu0 0.0
        %445 = vmatpush1.msra.mxu0 0.0
        %446 = vmatprep.subr.mxu0 0.0
        %447 = vmatpush1.msra.mxu0 0.0
        %448 = vmatprep.subr.mxu0 0.0
        %449 = vmatpush1.msra.mxu0 0.0
        %450 = vmatprep.subr.mxu0 0.0
        %451 = vmatpush1.msra.mxu0 0.0
        %452 = vmatprep.subr.mxu0 0.0
        %453 = vmatpush1.msra.mxu0 0.0
        %454 = vmatprep.subr.mxu0 0.0
        %455 = vmatpush1.msra.mxu0 0.0
        %456 = vmatprep.subr.mxu0 0.0
        %457 = vmatpush1.msra.mxu0 0.0
        %458 = vmatprep.subr.mxu0 0.0
        %459 = vmatpush1.msra.mxu0 0.0
        %460 = vmatprep.subr.mxu0 0.0
        %461 = vmatpush1.msra.mxu0 0.0
        %462 = vmatprep.subr.mxu0 0.0
        %463 = vmatpush1.msra.mxu0 0.0
        %464 = vmatprep.subr.mxu0 0.0
        %465 = vmatpush1.msra.mxu0 0.0
        %466 = vmatprep.subr.mxu0 0.0
        %467 = vmatpush1.msra.mxu0 0.0
        %468 = vmatprep.subr.mxu0 0.0
        %469 = vmatpush1.msra.mxu0 0.0
        %470 = vmatprep.subr.mxu0 0.0
        %471 = vmatpush1.msra.mxu0 0.0
        %472 = vmatprep.mubr.f32.mxu0 0.0
        %473 = vmatmul.mubr.f32.gmra.mrb[0].mxu0 %v406
        %v474 = vpop.f32.mrb[0].mxu0
        %v475 = vadd.f32 0.0, %v474
        %v476 = vpop.f32.mrb[0].mxu0
        %477 = vdwg.mxu0
        %v478 = vld [vmem:[%s6] sm:$0xff]
        %v479 = vld [vmem:[%s6 + $0x8] sm:$0xff]
        %v480 = vld [vmem:[%s6 + $0x10] sm:$0xff]
        %v481 = vld [vmem:[%s6 + $0x18] sm:$0xff]
        %v483 = vsel %vm327, %v317, 0
        %485 = vmatprep.subr.mxu0 0.0
        %486 = vmatpush1.msra.mxu0 %v478
        %487 = vmatprep.subr.mxu0 0.0
        %488 = vmatpush1.msra.mxu0 %v479
        %489 = vmatprep.subr.mxu0 0.0
        %490 = vmatpush1.msra.mxu0 %v480
        %491 = vmatprep.subr.mxu0 0.0
        %492 = vmatpush1.msra.mxu0 %v481
        %493 = vmatprep.subr.mxu0 0.0
        %494 = vmatpush1.msra.mxu0 0.0
        %495 = vmatprep.subr.mxu0 0.0
        %496 = vmatpush1.msra.mxu0 0.0
        %497 = vmatprep.subr.mxu0 0.0
        %498 = vmatpush1.msra.mxu0 0.0
        %499 = vmatprep.subr.mxu0 0.0
        %500 = vmatpush1.msra.mxu0 0.0
        %501 = vmatprep.subr.mxu0 0.0
        %502 = vmatpush1.msra.mxu0 0.0
        %503 = vmatprep.subr.mxu0 0.0
        %504 = vmatpush1.msra.mxu0 0.0
        %505 = vmatprep.subr.mxu0 0.0
        %506 = vmatpush1.msra.mxu0 0.0
        %507 = vmatprep.subr.mxu0 0.0
        %508 = vmatpush1.msra.mxu0 0.0
        %509 = vmatprep.subr.mxu0 0.0
        %510 = vmatpush1.msra.mxu0 0.0
        %511 = vmatprep.subr.mxu0 0.0
        %512 = vmatpush1.msra.mxu0 0.0
        %513 = vmatprep.subr.mxu0 0.0
        %514 = vmatpush1.msra.mxu0 0.0
        %515 = vmatprep.subr.mxu0 0.0
        %516 = vmatpush1.msra.mxu0 0.0
        %517 = vmatprep.subr.mxu0 0.0
        %518 = vmatpush1.msra.mxu0 0.0
        %519 = vmatprep.subr.mxu0 0.0
        %520 = vmatpush1.msra.mxu0 0.0
        %521 = vmatprep.subr.mxu0 0.0
        %522 = vmatpush1.msra.mxu0 0.0
        %523 = vmatprep.subr.mxu0 0.0
        %524 = vmatpush1.msra.mxu0 0.0
        %525 = vmatprep.subr.mxu0 0.0
        %526 = vmatpush1.msra.mxu0 0.0
        %527 = vmatprep.subr.mxu0 0.0
        %528 = vmatpush1.msra.mxu0 0.0
        %529 = vmatprep.subr.mxu0 0.0
        %530 = vmatpush1.msra.mxu0 0.0
        %531 = vmatprep.subr.mxu0 0.0
        %532 = vmatpush1.msra.mxu0 0.0
        %533 = vmatprep.subr.mxu0 0.0
        %534 = vmatpush1.msra.mxu0 0.0
        %535 = vmatprep.subr.mxu0 0.0
        %536 = vmatpush1.msra.mxu0 0.0
        %537 = vmatprep.subr.mxu0 0.0
        %538 = vmatpush1.msra.mxu0 0.0
        %539 = vmatprep.subr.mxu0 0.0
        %540 = vmatpush1.msra.mxu0 0.0
        %541 = vmatprep.subr.mxu0 0.0
        %542 = vmatpush1.msra.mxu0 0.0
        %543 = vmatprep.subr.mxu0 0.0
        %544 = vmatpush1.msra.mxu0 0.0
        %545 = vmatprep.subr.mxu0 0.0
        %546 = vmatpush1.msra.mxu0 0.0
        %547 = vmatprep.subr.mxu0 0.0
        %548 = vmatpush1.msra.mxu0 0.0
        %549 = vmatprep.mubr.f32.mxu0 0.0
        %550 = vmatmul.mubr.f32.gmra.mrb[0].mxu0 %v483
        %v551 = vpop.f32.mrb[0].mxu0
        %v552 = vadd.f32 0.0, %v551
        %v553 = vpop.f32.mrb[0].mxu0
        %554 = vdwg.mxu0
        %vm555 = vcmask 64512
        %v557 = vsel %vm555, %v398, 0
        %v560 = vsel %vm555, %v475, 0
        %562 = vmatprep.subr.mxu0 0.0
        %563 = vmatpush1.xpose.msra.mxu0 %v560
        %564 = vmatprep.subr.mxu0 0.0
        %565 = vmatpush1.xpose.msra.mxu0 0.0
        %566 = vmatprep.subr.mxu0 0.0
        %567 = vmatpush1.xpose.msra.mxu0 0.0
        %568 = vmatprep.subr.mxu0 0.0
        %569 = vmatpush1.xpose.msra.mxu0 0.0
        %570 = vmatprep.subr.mxu0 0.0
        %571 = vmatpush1.xpose.msra.mxu0 0.0
        %572 = vmatprep.subr.mxu0 0.0
        %573 = vmatpush1.xpose.msra.mxu0 0.0
        %574 = vmatprep.subr.mxu0 0.0
        %575 = vmatpush1.xpose.msra.mxu0 0.0
        %576 = vmatprep.subr.mxu0 0.0
        %577 = vmatpush1.xpose.msra.mxu0 0.0
        %578 = vmatprep.subr.mxu0 0.0
        %579 = vmatpush1.xpose.msra.mxu0 0.0
        %580 = vmatprep.subr.mxu0 0.0
        %581 = vmatpush1.xpose.msra.mxu0 0.0
        %582 = vmatprep.subr.mxu0 0.0
        %583 = vmatpush1.xpose.msra.mxu0 0.0
        %584 = vmatprep.subr.mxu0 0.0
        %585 = vmatpush1.xpose.msra.mxu0 0.0
        %586 = vmatprep.subr.mxu0 0.0
        %587 = vmatpush1.xpose.msra.mxu0 0.0
        %588 = vmatprep.subr.mxu0 0.0
        %589 = vmatpush1.xpose.msra.mxu0 0.0
        %590 = vmatprep.subr.mxu0 0.0
        %591 = vmatpush1.xpose.msra.mxu0 0.0
        %592 = vmatprep.subr.mxu0 0.0
        %593 = vmatpush1.xpose.msra.mxu0 0.0
        %594 = vmatprep.subr.mxu0 0.0
        %595 = vmatpush1.xpose.msra.mxu0 0.0
        %596 = vmatprep.subr.mxu0 0.0
        %597 = vmatpush1.xpose.msra.mxu0 0.0
        %598 = vmatprep.subr.mxu0 0.0
        %599 = vmatpush1.xpose.msra.mxu0 0.0
        %600 = vmatprep.subr.mxu0 0.0
        %601 = vmatpush1.xpose.msra.mxu0 0.0
        %602 = vmatprep.subr.mxu0 0.0
        %603 = vmatpush1.xpose.msra.mxu0 0.0
        %604 = vmatprep.subr.mxu0 0.0
        %605 = vmatpush1.xpose.msra.mxu0 0.0
        %606 = vmatprep.subr.mxu0 0.0
        %607 = vmatpush1.xpose.msra.mxu0 0.0
        %608 = vmatprep.subr.mxu0 0.0
        %609 = vmatpush1.xpose.msra.mxu0 0.0
        %610 = vmatprep.subr.mxu0 0.0
        %611 = vmatpush1.xpose.msra.mxu0 0.0
        %612 = vmatprep.subr.mxu0 0.0
        %613 = vmatpush1.xpose.msra.mxu0 0.0
        %614 = vmatprep.subr.mxu0 0.0
        %615 = vmatpush1.xpose.msra.mxu0 0.0
        %616 = vmatprep.subr.mxu0 0.0
        %617 = vmatpush1.xpose.msra.mxu0 0.0
        %618 = vmatprep.subr.mxu0 0.0
        %619 = vmatpush1.xpose.msra.mxu0 0.0
        %620 = vmatprep.subr.mxu0 0.0
        %621 = vmatpush1.xpose.msra.mxu0 0.0
        %622 = vmatprep.subr.mxu0 0.0
        %623 = vmatpush1.xpose.msra.mxu0 0.0
        %624 = vmatprep.subr.mxu0 0.0
        %625 = vmatpush1.xpose.msra.mxu0 0.0
        %626 = vmatprep.mubr.f32.mxu0 0.0
        %627 = vmatmul.mubr.f32.gmra.mrb[0].mxu0 %v557
        %v628 = vpop.f32.mrb[0].mxu0
        %v629 = vadd.f32 0.0, %v628
        %v630 = vpop.f32.mrb[0].mxu0
        %631 = vdwg.mxu0
        %v632 = vsel %vm322, %v629, -1000000.0
        %v633 = vsel %vm555, %v632, -inf
        %634 = vmax.xlane.f32.xlu0 %v633
        %v635 = vpop.xlane.xlu0 %634
        %v636 = vsub.f32 %v632, %v635
        %v637 = vmul.f32 %v636, 1.442695
        %v638 = vpow.pop %v637
        %v639 = vsel %vm555, %v638, 0.0
        %640 = vadd.xlane.f32.xlu0 %v639
        %v641 = vpop.xlane.xlu0 %640
        %v642 = vrcp.pop %v641
        %v643 = vmul.f32 %v641, %v642
        %v644 = vsub.f32 2.0, %v643
        %v645 = vmul.f32 %v642, %v644
        %v647 = vsel %vm555, %v638, 0
        %649 = vmatprep.subr.mxu0 0.0
        %650 = vmatpush1.msra.mxu0 %v552
        %651 = vmatprep.subr.mxu0 0.0
        %652 = vmatpush1.msra.mxu0 0.0
        %653 = vmatprep.subr.mxu0 0.0
        %654 = vmatpush1.msra.mxu0 0.0
        %655 = vmatprep.subr.mxu0 0.0
        %656 = vmatpush1.msra.mxu0 0.0
        %657 = vmatprep.subr.mxu0 0.0
        %658 = vmatpush1.msra.mxu0 0.0
        %659 = vmatprep.subr.mxu0 0.0
        %660 = vmatpush1.msra.mxu0 0.0
        %661 = vmatprep.subr.mxu0 0.0
        %662 = vmatpush1.msra.mxu0 0.0
        %663 = vmatprep.subr.mxu0 0.0
        %664 = vmatpush1.msra.mxu0 0.0
        %665 = vmatprep.subr.mxu0 0.0
        %666 = vmatpush1.msra.mxu0 0.0
        %667 = vmatprep.subr.mxu0 0.0
        %668 = vmatpush1.msra.mxu0 0.0
        %669 = vmatprep.subr.mxu0 0.0
        %670 = vmatpush1.msra.mxu0 0.0
        %671 = vmatprep.subr.mxu0 0.0
        %672 = vmatpush1.msra.mxu0 0.0
        %673 = vmatprep.subr.mxu0 0.0
        %674 = vmatpush1.msra.mxu0 0.0
        %675 = vmatprep.subr.mxu0 0.0
        %676 = vmatpush1.msra.mxu0 0.0
        %677 = vmatprep.subr.mxu0 0.0
        %678 = vmatpush1.msra.mxu0 0.0
        %679 = vmatprep.subr.mxu0 0.0
        %680 = vmatpush1.msra.mxu0 0.0
        %681 = vmatprep.subr.mxu0 0.0
        %682 = vmatpush1.msra.mxu0 0.0
        %683 = vmatprep.subr.mxu0 0.0
        %684 = vmatpush1.msra.mxu0 0.0
        %685 = vmatprep.subr.mxu0 0.0
        %686 = vmatpush1.msra.mxu0 0.0
        %687 = vmatprep.subr.mxu0 0.0
        %688 = vmatpush1.msra.mxu0 0.0
        %689 = vmatprep.subr.mxu0 0.0
        %690 = vmatpush1.msra.mxu0 0.0
        %691 = vmatprep.subr.mxu0 0.0
        %692 = vmatpush1.msra.mxu0 0.0
        %693 = vmatprep.subr.mxu0 0.0
        %694 = vmatpush1.msra.mxu0 0.0
        %695 = vmatprep.subr.mxu0 0.0
        %696 = vmatpush1.msra.mxu0 0.0
        %697 = vmatprep.subr.mxu0 0.0
        %698 = vmatpush1.msra.mxu0 0.0
        %699 = vmatprep.subr.mxu0 0.0
        %700 = vmatpush1.msra.mxu0 0.0
        %701 = vmatprep.subr.mxu0 0.0
        %702 = vmatpush1.msra.mxu0 0.0
        %703 = vmatprep.subr.mxu0 0.0
        %704 = vmatpush1.msra.mxu0 0.0
        %705 = vmatprep.subr.mxu0 0.0
        %706 = vmatpush1.msra.mxu0 0.0
        %707 = vmatprep.subr.mxu0 0.0
        %708 = vmatpush1.msra.mxu0 0.0
        %709 = vmatprep.subr.mxu0 0.0
        %710 = vmatpush1.msra.mxu0 0.0
        %711 = vmatprep.subr.mxu0 0.0
        %712 = vmatpush1.msra.mxu0 0.0
        %713 = vmatprep.mubr.f32.mxu0 0.0
        %714 = vmatmul.mubr.f32.gmra.mrb[0].mxu0 %v647
        %v715 = vpop.f32.mrb[0].mxu0
        %v716 = vadd.f32 0.0, %v715
        %v717 = vpop.f32.mrb[0].mxu0
        %718 = vdwg.mxu0
        %v719 = vmul.f32 %v716, %v645
        %v720 = vld [vmem:[%s7] sm:$0xff]
        %s721 = scalar_lea.vmem %s4, 32
        %v722 = vld [vmem:[%s721] sm:$0xff]
        %v723 = vld [vmem:[%s721 + $0x8] sm:$0xff]
        %v724 = vld [vmem:[%s721 + $0x10] sm:$0xff]
        %v725 = vld [vmem:[%s721 + $0x18] sm:$0xff]
        %726 = vmatprep.subr.mxu0 0.0
        %727 = vmatpush1.msra.mxu0 %v722
        %728 = vmatprep.subr.mxu0 0.0
        %729 = vmatpush1.msra.mxu0 %v723
        %730 = vmatprep.subr.mxu0 0.0
        %731 = vmatpush1.msra.mxu0 %v724
        %732 = vmatprep.subr.mxu0 0.0
        %733 = vmatpush1.msra.mxu0 %v725
        %734 = vmatprep.subr.mxu0 0.0
        %735 = vmatpush1.msra.mxu0 0.0
        %736 = vmatprep.subr.mxu0 0.0
        %737 = vmatpush1.msra.mxu0 0.0
        %738 = vmatprep.subr.mxu0 0.0
        %739 = vmatpush1.msra.mxu0 0.0
        %740 = vmatprep.subr.mxu0 0.0
        %741 = vmatpush1.msra.mxu0 0.0
        %742 = vmatprep.subr.mxu0 0.0
        %743 = vmatpush1.msra.mxu0 0.0
        %744 = vmatprep.subr.mxu0 0.0
        %745 = vmatpush1.msra.mxu0 0.0
        %746 = vmatprep.subr.mxu0 0.0
        %747 = vmatpush1.msra.mxu0 0.0
        %748 = vmatprep.subr.mxu0 0.0
        %749 = vmatpush1.msra.mxu0 0.0
        %750 = vmatprep.subr.mxu0 0.0
        %751 = vmatpush1.msra.mxu0 0.0
        %752 = vmatprep.subr.mxu0 0.0
        %753 = vmatpush1.msra.mxu0 0.0
        %754 = vmatprep.subr.mxu0 0.0
        %755 = vmatpush1.msra.mxu0 0.0
        %756 = vmatprep.subr.mxu0 0.0
        %757 = vmatpush1.msra.mxu0 0.0
        %758 = vmatprep.subr.mxu0 0.0
        %759 = vmatpush1.msra.mxu0 0.0
        %760 = vmatprep.subr.mxu0 0.0
        %761 = vmatpush1.msra.mxu0 0.0
        %762 = vmatprep.subr.mxu0 0.0
        %763 = vmatpush1.msra.mxu0 0.0
        %764 = vmatprep.subr.mxu0 0.0
        %765 = vmatpush1.msra.mxu0 0.0
        %766 = vmatprep.subr.mxu0 0.0
        %767 = vmatpush1.msra.mxu0 0.0
        %768 = vmatprep.subr.mxu0 0.0
        %769 = vmatpush1.msra.mxu0 0.0
        %770 = vmatprep.subr.mxu0 0.0
        %771 = vmatpush1.msra.mxu0 0.0
        %772 = vmatprep.subr.mxu0 0.0
        %773 = vmatpush1.msra.mxu0 0.0
        %774 = vmatprep.subr.mxu0 0.0
        %775 = vmatpush1.msra.mxu0 0.0
        %776 = vmatprep.subr.mxu0 0.0
        %777 = vmatpush1.msra.mxu0 0.0
        %778 = vmatprep.subr.mxu0 0.0
        %779 = vmatpush1.msra.mxu0 0.0
        %780 = vmatprep.subr.mxu0 0.0
        %781 = vmatpush1.msra.mxu0 0.0
        %782 = vmatprep.subr.mxu0 0.0
        %783 = vmatpush1.msra.mxu0 0.0
        %784 = vmatprep.subr.mxu0 0.0
        %785 = vmatpush1.msra.mxu0 0.0
        %786 = vmatprep.subr.mxu0 0.0
        %787 = vmatpush1.msra.mxu0 0.0
        %788 = vmatprep.subr.mxu0 0.0
        %789 = vmatpush1.msra.mxu0 0.0
        %790 = vmatprep.mubr.f32.mxu0 0.0
        %791 = vmatmul.mubr.f32.gmra.mrb[0].mxu0 %v329
        %v792 = vpop.f32.mrb[0].mxu0
        %v793 = vadd.f32 0.0, %v792
        %v794 = vpop.f32.mrb[0].mxu0
        %795 = vdwg.mxu0
        %s796 = scalar_lea.vmem %s5, 32
        %v797 = vld [vmem:[%s796] sm:$0xff]
        %v798 = vld [vmem:[%s796 + $0x8] sm:$0xff]
        %v799 = vld [vmem:[%s796 + $0x10] sm:$0xff]
        %v800 = vld [vmem:[%s796 + $0x18] sm:$0xff]
        %801 = vmatprep.subr.mxu0 0.0
        %802 = vmatpush1.msra.mxu0 %v797
        %803 = vmatprep.subr.mxu0 0.0
        %804 = vmatpush1.msra.mxu0 %v798
        %805 = vmatprep.subr.mxu0 0.0
        %806 = vmatpush1.msra.mxu0 %v799
        %807 = vmatprep.subr.mxu0 0.0
        %808 = vmatpush1.msra.mxu0 %v800
        %809 = vmatprep.subr.mxu0 0.0
        %810 = vmatpush1.msra.mxu0 0.0
        %811 = vmatprep.subr.mxu0 0.0
        %812 = vmatpush1.msra.mxu0 0.0
        %813 = vmatprep.subr.mxu0 0.0
        %814 = vmatpush1.msra.mxu0 0.0
        %815 = vmatprep.subr.mxu0 0.0
        %816 = vmatpush1.msra.mxu0 0.0
        %817 = vmatprep.subr.mxu0 0.0
        %818 = vmatpush1.msra.mxu0 0.0
        %819 = vmatprep.subr.mxu0 0.0
        %820 = vmatpush1.msra.mxu0 0.0
        %821 = vmatprep.subr.mxu0 0.0
        %822 = vmatpush1.msra.mxu0 0.0
        %823 = vmatprep.subr.mxu0 0.0
        %824 = vmatpush1.msra.mxu0 0.0
        %825 = vmatprep.subr.mxu0 0.0
        %826 = vmatpush1.msra.mxu0 0.0
        %827 = vmatprep.subr.mxu0 0.0
        %828 = vmatpush1.msra.mxu0 0.0
        %829 = vmatprep.subr.mxu0 0.0
        %830 = vmatpush1.msra.mxu0 0.0
        %831 = vmatprep.subr.mxu0 0.0
        %832 = vmatpush1.msra.mxu0 0.0
        %833 = vmatprep.subr.mxu0 0.0
        %834 = vmatpush1.msra.mxu0 0.0
        %835 = vmatprep.subr.mxu0 0.0
        %836 = vmatpush1.msra.mxu0 0.0
        %837 = vmatprep.subr.mxu0 0.0
        %838 = vmatpush1.msra.mxu0 0.0
        %839 = vmatprep.subr.mxu0 0.0
        %840 = vmatpush1.msra.mxu0 0.0
        %841 = vmatprep.subr.mxu0 0.0
        %842 = vmatpush1.msra.mxu0 0.0
        %843 = vmatprep.subr.mxu0 0.0
        %844 = vmatpush1.msra.mxu0 0.0
        %845 = vmatprep.subr.mxu0 0.0
        %846 = vmatpush1.msra.mxu0 0.0
        %847 = vmatprep.subr.mxu0 0.0
        %848 = vmatpush1.msra.mxu0 0.0
        %849 = vmatprep.subr.mxu0 0.0
        %850 = vmatpush1.msra.mxu0 0.0
        %851 = vmatprep.subr.mxu0 0.0
        %852 = vmatpush1.msra.mxu0 0.0
        %853 = vmatprep.subr.mxu0 0.0
        %854 = vmatpush1.msra.mxu0 0.0
        %855 = vmatprep.subr.mxu0 0.0
        %856 = vmatpush1.msra.mxu0 0.0
        %857 = vmatprep.subr.mxu0 0.0
        %858 = vmatpush1.msra.mxu0 0.0
        %859 = vmatprep.subr.mxu0 0.0
        %860 = vmatpush1.msra.mxu0 0.0
        %861 = vmatprep.subr.mxu0 0.0
        %862 = vmatpush1.msra.mxu0 0.0
        %863 = vmatprep.subr.mxu0 0.0
        %864 = vmatpush1.msra.mxu0 0.0
        %865 = vmatprep.mubr.f32.mxu0 0.0
        %866 = vmatmul.mubr.f32.gmra.mrb[0].mxu0 %v406
        %v867 = vpop.f32.mrb[0].mxu0
        %v868 = vadd.f32 0.0, %v867
        %v869 = vpop.f32.mrb[0].mxu0
        %870 = vdwg.mxu0
        %s871 = scalar_lea.vmem %s6, 32
        %v872 = vld [vmem:[%s871] sm:$0xff]
        %v873 = vld [vmem:[%s871 + $0x8] sm:$0xff]
        %v874 = vld [vmem:[%s871 + $0x10] sm:$0xff]
        %v875 = vld [vmem:[%s871 + $0x18] sm:$0xff]
        %876 = vmatprep.subr.mxu0 0.0
        %877 = vmatpush1.msra.mxu0 %v872
        %878 = vmatprep.subr.mxu0 0.0
        %879 = vmatpush1.msra.mxu0 %v873
        %880 = vmatprep.subr.mxu0 0.0
        %881 = vmatpush1.msra.mxu0 %v874
        %882 = vmatprep.subr.mxu0 0.0
        %883 = vmatpush1.msra.mxu0 %v875
        %884 = vmatprep.subr.mxu0 0.0
        %885 = vmatpush1.msra.mxu0 0.0
        %886 = vmatprep.subr.mxu0 0.0
        %887 = vmatpush1.msra.mxu0 0.0
        %888 = vmatprep.subr.mxu0 0.0
        %889 = vmatpush1.msra.mxu0 0.0
        %890 = vmatprep.subr.mxu0 0.0
        %891 = vmatpush1.msra.mxu0 0.0
        %892 = vmatprep.subr.mxu0 0.0
        %893 = vmatpush1.msra.mxu0 0.0
        %894 = vmatprep.subr.mxu0 0.0
        %895 = vmatpush1.msra.mxu0 0.0
        %896 = vmatprep.subr.mxu0 0.0
        %897 = vmatpush1.msra.mxu0 0.0
        %898 = vmatprep.subr.mxu0 0.0
        %899 = vmatpush1.msra.mxu0 0.0
        %900 = vmatprep.subr.mxu0 0.0
        %901 = vmatpush1.msra.mxu0 0.0
        %902 = vmatprep.subr.mxu0 0.0
        %903 = vmatpush1.msra.mxu0 0.0
        %904 = vmatprep.subr.mxu0 0.0
        %905 = vmatpush1.msra.mxu0 0.0
        %906 = vmatprep.subr.mxu0 0.0
        %907 = vmatpush1.msra.mxu0 0.0
        %908 = vmatprep.subr.mxu0 0.0
        %909 = vmatpush1.msra.mxu0 0.0
        %910 = vmatprep.subr.mxu0 0.0
        %911 = vmatpush1.msra.mxu0 0.0
        %912 = vmatprep.subr.mxu0 0.0
        %913 = vmatpush1.msra.mxu0 0.0
        %914 = vmatprep.subr.mxu0 0.0
        %915 = vmatpush1.msra.mxu0 0.0
        %916 = vmatprep.subr.mxu0 0.0
        %917 = vmatpush1.msra.mxu0 0.0
        %918 = vmatprep.subr.mxu0 0.0
        %919 = vmatpush1.msra.mxu0 0.0
        %920 = vmatprep.subr.mxu0 0.0
        %921 = vmatpush1.msra.mxu0 0.0
        %922 = vmatprep.subr.mxu0 0.0
        %923 = vmatpush1.msra.mxu0 0.0
        %924 = vmatprep.subr.mxu0 0.0
        %925 = vmatpush1.msra.mxu0 0.0
        %926 = vmatprep.subr.mxu0 0.0
        %927 = vmatpush1.msra.mxu0 0.0
        %928 = vmatprep.subr.mxu0 0.0
        %929 = vmatpush1.msra.mxu0 0.0
        %930 = vmatprep.subr.mxu0 0.0
        %931 = vmatpush1.msra.mxu0 0.0
        %932 = vmatprep.subr.mxu0 0.0
        %933 = vmatpush1.msra.mxu0 0.0
        %934 = vmatprep.subr.mxu0 0.0
        %935 = vmatpush1.msra.mxu0 0.0
        %936 = vmatprep.subr.mxu0 0.0
        %937 = vmatpush1.msra.mxu0 0.0
        %938 = vmatprep.subr.mxu0 0.0
        %939 = vmatpush1.msra.mxu0 0.0
        %940 = vmatprep.mubr.f32.mxu0 0.0
        %941 = vmatmul.mubr.f32.gmra.mrb[0].mxu0 %v483
        %v942 = vpop.f32.mrb[0].mxu0
        %v943 = vadd.f32 0.0, %v942
        %v944 = vpop.f32.mrb[0].mxu0
        %945 = vdwg.mxu0
        %v947 = vsel %vm555, %v793, 0
        %v950 = vsel %vm555, %v868, 0
        %952 = vmatprep.subr.mxu0 0.0
        %953 = vmatpush1.xpose.msra.mxu0 %v950
        %954 = vmatprep.subr.mxu0 0.0
        %955 = vmatpush1.xpose.msra.mxu0 0.0
        %956 = vmatprep.subr.mxu0 0.0
        %957 = vmatpush1.xpose.msra.mxu0 0.0
        %958 = vmatprep.subr.mxu0 0.0
        %959 = vmatpush1.xpose.msra.mxu0 0.0
        %960 = vmatprep.subr.mxu0 0.0
        %961 = vmatpush1.xpose.msra.mxu0 0.0
        %962 = vmatprep.subr.mxu0 0.0
        %963 = vmatpush1.xpose.msra.mxu0 0.0
        %964 = vmatprep.subr.mxu0 0.0
        %965 = vmatpush1.xpose.msra.mxu0 0.0
        %966 = vmatprep.subr.mxu0 0.0
        %967 = vmatpush1.xpose.msra.mxu0 0.0
        %968 = vmatprep.subr.mxu0 0.0
        %969 = vmatpush1.xpose.msra.mxu0 0.0
        %970 = vmatprep.subr.mxu0 0.0
        %971 = vmatpush1.xpose.msra.mxu0 0.0
        %972 = vmatprep.subr.mxu0 0.0
        %973 = vmatpush1.xpose.msra.mxu0 0.0
        %974 = vmatprep.subr.mxu0 0.0
        %975 = vmatpush1.xpose.msra.mxu0 0.0
        %976 = vmatprep.subr.mxu0 0.0
        %977 = vmatpush1.xpose.msra.mxu0 0.0
        %978 = vmatprep.subr.mxu0 0.0
        %979 = vmatpush1.xpose.msra.mxu0 0.0
        %980 = vmatprep.subr.mxu0 0.0
        %981 = vmatpush1.xpose.msra.mxu0 0.0
        %982 = vmatprep.subr.mxu0 0.0
        %983 = vmatpush1.xpose.msra.mxu0 0.0
        %984 = vmatprep.subr.mxu0 0.0
        %985 = vmatpush1.xpose.msra.mxu0 0.0
        %986 = vmatprep.subr.mxu0 0.0
        %987 = vmatpush1.xpose.msra.mxu0 0.0
        %988 = vmatprep.subr.mxu0 0.0
        %989 = vmatpush1.xpose.msra.mxu0 0.0
        %990 = vmatprep.subr.mxu0 0.0
        %991 = vmatpush1.xpose.msra.mxu0 0.0
        %992 = vmatprep.subr.mxu0 0.0
        %993 = vmatpush1.xpose.msra.mxu0 0.0
        %994 = vmatprep.subr.mxu0 0.0
        %995 = vmatpush1.xpose.msra.mxu0 0.0
        %996 = vmatprep.subr.mxu0 0.0
        %997 = vmatpush1.xpose.msra.mxu0 0.0
        %998 = vmatprep.subr.mxu0 0.0
        %999 = vmatpush1.xpose.msra.mxu0 0.0
        %1000 = vmatprep.subr.mxu0 0.0
        %1001 = vmatpush1.xpose.msra.mxu0 0.0
        %1002 = vmatprep.subr.mxu0 0.0
        %1003 = vmatpush1.xpose.msra.mxu0 0.0
        %1004 = vmatprep.subr.mxu0 0.0
        %1005 = vmatpush1.xpose.msra.mxu0 0.0
        %1006 = vmatprep.subr.mxu0 0.0
        %1007 = vmatpush1.xpose.msra.mxu0 0.0
        %1008 = vmatprep.subr.mxu0 0.0
        %1009 = vmatpush1.xpose.msra.mxu0 0.0
        %1010 = vmatprep.subr.mxu0 0.0
        %1011 = vmatpush1.xpose.msra.mxu0 0.0
        %1012 = vmatprep.subr.mxu0 0.0
        %1013 = vmatpush1.xpose.msra.mxu0 0.0
        %1014 = vmatprep.subr.mxu0 0.0
        %1015 = vmatpush1.xpose.msra.mxu0 0.0
        %1016 = vmatprep.mubr.f32.mxu0 0.0
        %1017 = vmatmul.mubr.f32.gmra.mrb[0].mxu0 %v947
        %v1018 = vpop.f32.mrb[0].mxu0
        %v1019 = vadd.f32 0.0, %v1018
        %v1020 = vpop.f32.mrb[0].mxu0
        %1021 = vdwg.mxu0
        %v1022 = vsel %vm322, %v1019, -1000000.0
        %v1023 = vsel %vm555, %v1022, -inf
        %1024 = vmax.xlane.f32.xlu0 %v1023
        %v1025 = vpop.xlane.xlu0 %1024
        %v1026 = vsub.f32 %v1022, %v1025
        %v1027 = vmul.f32 %v1026, 1.442695
        %v1028 = vpow.pop %v1027
        %v1029 = vsel %vm555, %v1028, 0.0
        %1030 = vadd.xlane.f32.xlu0 %v1029
        %v1031 = vpop.xlane.xlu0 %1030
        %v1032 = vrcp.pop %v1031
        %v1033 = vmul.f32 %v1031, %v1032
        %v1034 = vsub.f32 2.0, %v1033
        %v1035 = vmul.f32 %v1032, %v1034
        %v1037 = vsel %vm555, %v1028, 0
        %1039 = vmatprep.subr.mxu0 0.0
        %1040 = vmatpush1.msra.mxu0 %v943
        %1041 = vmatprep.subr.mxu0 0.0
        %1042 = vmatpush1.msra.mxu0 0.0
        %1043 = vmatprep.subr.mxu0 0.0
        %1044 = vmatpush1.msra.mxu0 0.0
        %1045 = vmatprep.subr.mxu0 0.0
        %1046 = vmatpush1.msra.mxu0 0.0
        %1047 = vmatprep.subr.mxu0 0.0
        %1048 = vmatpush1.msra.mxu0 0.0
        %1049 = vmatprep.subr.mxu0 0.0
        %1050 = vmatpush1.msra.mxu0 0.0
        %1051 = vmatprep.subr.mxu0 0.0
        %1052 = vmatpush1.msra.mxu0 0.0
        %1053 = vmatprep.subr.mxu0 0.0
        %1054 = vmatpush1.msra.mxu0 0.0
        %1055 = vmatprep.subr.mxu0 0.0
        %1056 = vmatpush1.msra.mxu0 0.0
        %1057 = vmatprep.subr.mxu0 0.0
        %1058 = vmatpush1.msra.mxu0 0.0
        %1059 = vmatprep.subr.mxu0 0.0
        %1060 = vmatpush1.msra.mxu0 0.0
        %1061 = vmatprep.subr.mxu0 0.0
        %1062 = vmatpush1.msra.mxu0 0.0
        %1063 = vmatprep.subr.mxu0 0.0
        %1064 = vmatpush1.msra.mxu0 0.0
        %1065 = vmatprep.subr.mxu0 0.0
        %1066 = vmatpush1.msra.mxu0 0.0
        %1067 = vmatprep.subr.mxu0 0.0
        %1068 = vmatpush1.msra.mxu0 0.0
        %1069 = vmatprep.subr.mxu0 0.0
        %1070 = vmatpush1.msra.mxu0 0.0
        %1071 = vmatprep.subr.mxu0 0.0
        %1072 = vmatpush1.msra.mxu0 0.0
        %1073 = vmatprep.subr.mxu0 0.0
        %1074 = vmatpush1.msra.mxu0 0.0
        %1075 = vmatprep.subr.mxu0 0.0
        %1076 = vmatpush1.msra.mxu0 0.0
        %1077 = vmatprep.subr.mxu0 0.0
        %1078 = vmatpush1.msra.mxu0 0.0
        %1079 = vmatprep.subr.mxu0 0.0
        %1080 = vmatpush1.msra.mxu0 0.0
        %1081 = vmatprep.subr.mxu0 0.0
        %1082 = vmatpush1.msra.mxu0 0.0
        %1083 = vmatprep.subr.mxu0 0.0
        %1084 = vmatpush1.msra.mxu0 0.0
        %1085 = vmatprep.subr.mxu0 0.0
        %1086 = vmatpush1.msra.mxu0 0.0
        %1087 = vmatprep.subr.mxu0 0.0
        %1088 = vmatpush1.msra.mxu0 0.0
        %1089 = vmatprep.subr.mxu0 0.0
        %1090 = vmatpush1.msra.mxu0 0.0
        %1091 = vmatprep.subr.mxu0 0.0
        %1092 = vmatpush1.msra.mxu0 0.0
        %1093 = vmatprep.subr.mxu0 0.0
        %1094 = vmatpush1.msra.mxu0 0.0
        %1095 = vmatprep.subr.mxu0 0.0
        %1096 = vmatpush1.msra.mxu0 0.0
        %1097 = vmatprep.subr.mxu0 0.0
        %1098 = vmatpush1.msra.mxu0 0.0
        %1099 = vmatprep.subr.mxu0 0.0
        %1100 = vmatpush1.msra.mxu0 0.0
        %1101 = vmatprep.subr.mxu0 0.0
        %1102 = vmatpush1.msra.mxu0 0.0
        %1103 = vmatprep.mubr.f32.mxu0 0.0
        %1104 = vmatmul.mubr.f32.gmra.mrb[0].mxu0 %v1037
        %v1105 = vpop.f32.mrb[0].mxu0
        %v1106 = vadd.f32 0.0, %v1105
        %v1107 = vpop.f32.mrb[0].mxu0
        %1108 = vdwg.mxu0
        %v1109 = vmul.f32 %v1106, %v1035
        %s1110 = scalar_lea.vmem %s7, 8
        %v1111 = vld [vmem:[%s1110] sm:$0xff]
        %v1113 = vsel %vm555, %v1109, 0
        %1115 = vmatprep.subr.mxu0 0.0
        %1116 = vmatpush1.msra.mxu0 %v1111
        %1117 = vmatprep.subr.mxu0 0.0
        %1118 = vmatpush1.msra.mxu0 0.0
        %1119 = vmatprep.subr.mxu0 0.0
        %1120 = vmatpush1.msra.mxu0 0.0
        %1121 = vmatprep.subr.mxu0 0.0
        %1122 = vmatpush1.msra.mxu0 0.0
        %1123 = vmatprep.subr.mxu0 0.0
        %1124 = vmatpush1.msra.mxu0 0.0
        %1125 = vmatprep.subr.mxu0 0.0
        %1126 = vmatpush1.msra.mxu0 0.0
        %1127 = vmatprep.subr.mxu0 0.0
        %1128 = vmatpush1.msra.mxu0 0.0
        %1129 = vmatprep.subr.mxu0 0.0
        %1130 = vmatpush1.msra.mxu0 0.0
        %1131 = vmatprep.subr.mxu0 0.0
        %1132 = vmatpush1.msra.mxu0 0.0
        %1133 = vmatprep.subr.mxu0 0.0
        %1134 = vmatpush1.msra.mxu0 0.0
        %1135 = vmatprep.subr.mxu0 0.0
        %1136 = vmatpush1.msra.mxu0 0.0
        %1137 = vmatprep.subr.mxu0 0.0
        %1138 = vmatpush1.msra.mxu0 0.0
        %1139 = vmatprep.subr.mxu0 0.0
        %1140 = vmatpush1.msra.mxu0 0.0
        %1141 = vmatprep.subr.mxu0 0.0
        %1142 = vmatpush1.msra.mxu0 0.0
        %1143 = vmatprep.subr.mxu0 0.0
        %1144 = vmatpush1.msra.mxu0 0.0
        %1145 = vmatprep.subr.mxu0 0.0
        %1146 = vmatpush1.msra.mxu0 0.0
        %1147 = vmatprep.subr.mxu0 0.0
        %1148 = vmatpush1.msra.mxu0 0.0
        %1149 = vmatprep.subr.mxu0 0.0
        %1150 = vmatpush1.msra.mxu0 0.0
        %1151 = vmatprep.subr.mxu0 0.0
        %1152 = vmatpush1.msra.mxu0 0.0
        %1153 = vmatprep.subr.mxu0 0.0
        %1154 = vmatpush1.msra.mxu0 0.0
        %1155 = vmatprep.subr.mxu0 0.0
        %1156 = vmatpush1.msra.mxu0 0.0
        %1157 = vmatprep.subr.mxu0 0.0
        %1158 = vmatpush1.msra.mxu0 0.0
        %1159 = vmatprep.subr.mxu0 0.0
        %1160 = vmatpush1.msra.mxu0 0.0
        %1161 = vmatprep.subr.mxu0 0.0
        %1162 = vmatpush1.msra.mxu0 0.0
        %1163 = vmatprep.subr.mxu0 0.0
        %1164 = vmatpush1.msra.mxu0 0.0
        %1165 = vmatprep.subr.mxu0 0.0
        %1166 = vmatpush1.msra.mxu0 0.0
        %1167 = vmatprep.subr.mxu0 0.0
        %1168 = vmatpush1.msra.mxu0 0.0
        %1169 = vmatprep.subr.mxu0 0.0
        %1170 = vmatpush1.msra.mxu0 0.0
        %1171 = vmatprep.subr.mxu0 0.0
        %1172 = vmatpush1.msra.mxu0 0.0
        %1173 = vmatprep.subr.mxu0 0.0
        %1174 = vmatpush1.msra.mxu0 0.0
        %1175 = vmatprep.subr.mxu0 0.0
        %1176 = vmatpush1.msra.mxu0 0.0
        %1177 = vmatprep.subr.mxu0 0.0
        %1178 = vmatpush1.msra.mxu0 0.0
        %1179 = vmatprep.mubr.f32.mxu0 0.0
        %1180 = vmatmul.mubr.f32.gmra.mrb[0].mxu0 %v1113
        %v1181 = vpop.f32.mrb[0].mxu0
        %v1182 = vadd.f32 0.0, %v1181
        %v1183 = vpop.f32.mrb[0].mxu0
        %1184 = vdwg.mxu0
        %v1186 = vsel %vm555, %v719, 0
        %1188 = vmatprep.subr.mxu0 0.0
        %1189 = vmatpush1.msra.mxu0 %v720
        %1190 = vmatprep.subr.mxu0 0.0
        %1191 = vmatpush1.msra.mxu0 0.0
        %1192 = vmatprep.subr.mxu0 0.0
        %1193 = vmatpush1.msra.mxu0 0.0
        %1194 = vmatprep.subr.mxu0 0.0
        %1195 = vmatpush1.msra.mxu0 0.0
        %1196 = vmatprep.subr.mxu0 0.0
        %1197 = vmatpush1.msra.mxu0 0.0
        %1198 = vmatprep.subr.mxu0 0.0
        %1199 = vmatpush1.msra.mxu0 0.0
        %1200 = vmatprep.subr.mxu0 0.0
        %1201 = vmatpush1.msra.mxu0 0.0
        %1202 = vmatprep.subr.mxu0 0.0
        %1203 = vmatpush1.msra.mxu0 0.0
        %1204 = vmatprep.subr.mxu0 0.0
        %1205 = vmatpush1.msra.mxu0 0.0
        %1206 = vmatprep.subr.mxu0 0.0
        %1207 = vmatpush1.msra.mxu0 0.0
        %1208 = vmatprep.subr.mxu0 0.0
        %1209 = vmatpush1.msra.mxu0 0.0
        %1210 = vmatprep.subr.mxu0 0.0
        %1211 = vmatpush1.msra.mxu0 0.0
        %1212 = vmatprep.subr.mxu0 0.0
        %1213 = vmatpush1.msra.mxu0 0.0
        %1214 = vmatprep.subr.mxu0 0.0
        %1215 = vmatpush1.msra.mxu0 0.0
        %1216 = vmatprep.subr.mxu0 0.0
        %1217 = vmatpush1.msra.mxu0 0.0
        %1218 = vmatprep.subr.mxu0 0.0
        %1219 = vmatpush1.msra.mxu0 0.0
        %1220 = vmatprep.subr.mxu0 0.0
        %1221 = vmatpush1.msra.mxu0 0.0
        %1222 = vmatprep.subr.mxu0 0.0
        %1223 = vmatpush1.msra.mxu0 0.0
        %1224 = vmatprep.subr.mxu0 0.0
        %1225 = vmatpush1.msra.mxu0 0.0
        %1226 = vmatprep.subr.mxu0 0.0
        %1227 = vmatpush1.msra.mxu0 0.0
        %1228 = vmatprep.subr.mxu0 0.0
        %1229 = vmatpush1.msra.mxu0 0.0
        %1230 = vmatprep.subr.mxu0 0.0
        %1231 = vmatpush1.msra.mxu0 0.0
        %1232 = vmatprep.subr.mxu0 0.0
        %1233 = vmatpush1.msra.mxu0 0.0
        %1234 = vmatprep.subr.mxu0 0.0
        %1235 = vmatpush1.msra.mxu0 0.0
        %1236 = vmatprep.subr.mxu0 0.0
        %1237 = vmatpush1.msra.mxu0 0.0
        %1238 = vmatprep.subr.mxu0 0.0
        %1239 = vmatpush1.msra.mxu0 0.0
        %1240 = vmatprep.subr.mxu0 0.0
        %1241 = vmatpush1.msra.mxu0 0.0
        %1242 = vmatprep.subr.mxu0 0.0
        %1243 = vmatpush1.msra.mxu0 0.0
        %1244 = vmatprep.subr.mxu0 0.0
        %1245 = vmatpush1.msra.mxu0 0.0
        %1246 = vmatprep.subr.mxu0 0.0
        %1247 = vmatpush1.msra.mxu0 0.0
        %1248 = vmatprep.subr.mxu0 0.0
        %1249 = vmatpush1.msra.mxu0 0.0
        %1250 = vmatprep.subr.mxu0 0.0
        %1251 = vmatpush1.msra.mxu0 0.0
        %1252 = vmatprep.mubr.f32.mxu0 0.0
        %1253 = vmatmul.mubr.f32.gmra.mrb[0].mxu0 %v1186
        %v1254 = vpop.f32.mrb[0].mxu0
        %v1255 = vadd.f32 %v1182, %v1254
        %v1256 = vpop.f32.mrb[0].mxu0
        %1257 = vdwg.mxu0
        %s1258 = scalar_lea.vmem %s4, 64
        %v1259 = vld [vmem:[%s1258] sm:$0xff]
        %v1260 = vld [vmem:[%s1258 + $0x8] sm:$0xff]
        %v1261 = vld [vmem:[%s1258 + $0x10] sm:$0xff]
        %v1262 = vld [vmem:[%s1258 + $0x18] sm:$0xff]
        %1263 = vmatprep.subr.mxu0 0.0
        %1264 = vmatpush1.msra.mxu0 %v1259
        %1265 = vmatprep.subr.mxu0 0.0
        %1266 = vmatpush1.msra.mxu0 %v1260
        %1267 = vmatprep.subr.mxu0 0.0
        %1268 = vmatpush1.msra.mxu0 %v1261
        %1269 = vmatprep.subr.mxu0 0.0
        %1270 = vmatpush1.msra.mxu0 %v1262
        %1271 = vmatprep.subr.mxu0 0.0
        %1272 = vmatpush1.msra.mxu0 0.0
        %1273 = vmatprep.subr.mxu0 0.0
        %1274 = vmatpush1.msra.mxu0 0.0
        %1275 = vmatprep.subr.mxu0 0.0
        %1276 = vmatpush1.msra.mxu0 0.0
        %1277 = vmatprep.subr.mxu0 0.0
        %1278 = vmatpush1.msra.mxu0 0.0
        %1279 = vmatprep.subr.mxu0 0.0
        %1280 = vmatpush1.msra.mxu0 0.0
        %1281 = vmatprep.subr.mxu0 0.0
        %1282 = vmatpush1.msra.mxu0 0.0
        %1283 = vmatprep.subr.mxu0 0.0
        %1284 = vmatpush1.msra.mxu0 0.0
        %1285 = vmatprep.subr.mxu0 0.0
        %1286 = vmatpush1.msra.mxu0 0.0
        %1287 = vmatprep.subr.mxu0 0.0
        %1288 = vmatpush1.msra.mxu0 0.0
        %1289 = vmatprep.subr.mxu0 0.0
        %1290 = vmatpush1.msra.mxu0 0.0
        %1291 = vmatprep.subr.mxu0 0.0
        %1292 = vmatpush1.msra.mxu0 0.0
        %1293 = vmatprep.subr.mxu0 0.0
        %1294 = vmatpush1.msra.mxu0 0.0
        %1295 = vmatprep.subr.mxu0 0.0
        %1296 = vmatpush1.msra.mxu0 0.0
        %1297 = vmatprep.subr.mxu0 0.0
        %1298 = vmatpush1.msra.mxu0 0.0
        %1299 = vmatprep.subr.mxu0 0.0
        %1300 = vmatpush1.msra.mxu0 0.0
        %1301 = vmatprep.subr.mxu0 0.0
        %1302 = vmatpush1.msra.mxu0 0.0
        %1303 = vmatprep.subr.mxu0 0.0
        %1304 = vmatpush1.msra.mxu0 0.0
        %1305 = vmatprep.subr.mxu0 0.0
        %1306 = vmatpush1.msra.mxu0 0.0
        %1307 = vmatprep.subr.mxu0 0.0
        %1308 = vmatpush1.msra.mxu0 0.0
        %1309 = vmatprep.subr.mxu0 0.0
        %1310 = vmatpush1.msra.mxu0 0.0
        %1311 = vmatprep.subr.mxu0 0.0
        %1312 = vmatpush1.msra.mxu0 0.0
        %1313 = vmatprep.subr.mxu0 0.0
        %1314 = vmatpush1.msra.mxu0 0.0
        %1315 = vmatprep.subr.mxu0 0.0
        %1316 = vmatpush1.msra.mxu0 0.0
        %1317 = vmatprep.subr.mxu0 0.0
        %1318 = vmatpush1.msra.mxu0 0.0
        %1319 = vmatprep.subr.mxu0 0.0
        %1320 = vmatpush1.msra.mxu0 0.0
        %1321 = vmatprep.subr.mxu0 0.0
        %1322 = vmatpush1.msra.mxu0 0.0
        %1323 = vmatprep.subr.mxu0 0.0
        %1324 = vmatpush1.msra.mxu0 0.0
        %1325 = vmatprep.subr.mxu0 0.0
        %1326 = vmatpush1.msra.mxu0 0.0
        %1327 = vmatprep.mubr.f32.mxu0 0.0
        %1328 = vmatmul.mubr.f32.gmra.mrb[0].mxu0 %v329
        %v1329 = vpop.f32.mrb[0].mxu0
        %v1330 = vadd.f32 0.0, %v1329
        %v1331 = vpop.f32.mrb[0].mxu0
        %1332 = vdwg.mxu0
        %s1333 = scalar_lea.vmem %s5, 64
        %v1334 = vld [vmem:[%s1333] sm:$0xff]
        %v1335 = vld [vmem:[%s1333 + $0x8] sm:$0xff]
        %v1336 = vld [vmem:[%s1333 + $0x10] sm:$0xff]
        %v1337 = vld [vmem:[%s1333 + $0x18] sm:$0xff]
        %1338 = vmatprep.subr.mxu0 0.0
        %1339 = vmatpush1.msra.mxu0 %v1334
        %1340 = vmatprep.subr.mxu0 0.0
        %1341 = vmatpush1.msra.mxu0 %v1335
        %1342 = vmatprep.subr.mxu0 0.0
        %1343 = vmatpush1.msra.mxu0 %v1336
        %1344 = vmatprep.subr.mxu0 0.0
        %1345 = vmatpush1.msra.mxu0 %v1337
        %1346 = vmatprep.subr.mxu0 0.0
        %1347 = vmatpush1.msra.mxu0 0.0
        %1348 = vmatprep.subr.mxu0 0.0
        %1349 = vmatpush1.msra.mxu0 0.0
        %1350 = vmatprep.subr.mxu0 0.0
        %1351 = vmatpush1.msra.mxu0 0.0
        %1352 = vmatprep.subr.mxu0 0.0
        %1353 = vmatpush1.msra.mxu0 0.0
        %1354 = vmatprep.subr.mxu0 0.0
        %1355 = vmatpush1.msra.mxu0 0.0
        %1356 = vmatprep.subr.mxu0 0.0
        %1357 = vmatpush1.msra.mxu0 0.0
        %1358 = vmatprep.subr.mxu0 0.0
        %1359 = vmatpush1.msra.mxu0 0.0
        %1360 = vmatprep.subr.mxu0 0.0
        %1361 = vmatpush1.msra.mxu0 0.0
        %1362 = vmatprep.subr.mxu0 0.0
        %1363 = vmatpush1.msra.mxu0 0.0
        %1364 = vmatprep.subr.mxu0 0.0
        %1365 = vmatpush1.msra.mxu0 0.0
        %1366 = vmatprep.subr.mxu0 0.0
        %1367 = vmatpush1.msra.mxu0 0.0
        %1368 = vmatprep.subr.mxu0 0.0
        %1369 = vmatpush1.msra.mxu0 0.0
        %1370 = vmatprep.subr.mxu0 0.0
        %1371 = vmatpush1.msra.mxu0 0.0
        %1372 = vmatprep.subr.mxu0 0.0
        %1373 = vmatpush1.msra.mxu0 0.0
        %1374 = vmatprep.subr.mxu0 0.0
        %1375 = vmatpush1.msra.mxu0 0.0
        %1376 = vmatprep.subr.mxu0 0.0
        %1377 = vmatpush1.msra.mxu0 0.0
        %1378 = vmatprep.subr.mxu0 0.0
        %1379 = vmatpush1.msra.mxu0 0.0
        %1380 = vmatprep.subr.mxu0 0.0
        %1381 = vmatpush1.msra.mxu0 0.0
        %1382 = vmatprep.subr.mxu0 0.0
        %1383 = vmatpush1.msra.mxu0 0.0
        %1384 = vmatprep.subr.mxu0 0.0
        %1385 = vmatpush1.msra.mxu0 0.0
        %1386 = vmatprep.subr.mxu0 0.0
        %1387 = vmatpush1.msra.mxu0 0.0
        %1388 = vmatprep.subr.mxu0 0.0
        %1389 = vmatpush1.msra.mxu0 0.0
        %1390 = vmatprep.subr.mxu0 0.0
        %1391 = vmatpush1.msra.mxu0 0.0
        %1392 = vmatprep.subr.mxu0 0.0
        %1393 = vmatpush1.msra.mxu0 0.0
        %1394 = vmatprep.subr.mxu0 0.0
        %1395 = vmatpush1.msra.mxu0 0.0
        %1396 = vmatprep.subr.mxu0 0.0
        %1397 = vmatpush1.msra.mxu0 0.0
        %1398 = vmatprep.subr.mxu0 0.0
        %1399 = vmatpush1.msra.mxu0 0.0
        %1400 = vmatprep.subr.mxu0 0.0
        %1401 = vmatpush1.msra.mxu0 0.0
        %1402 = vmatprep.mubr.f32.mxu0 0.0
        %1403 = vmatmul.mubr.f32.gmra.mrb[0].mxu0 %v406
        %v1404 = vpop.f32.mrb[0].mxu0
        %v1405 = vadd.f32 0.0, %v1404
        %v1406 = vpop.f32.mrb[0].mxu0
        %1407 = vdwg.mxu0
        %s1408 = scalar_lea.vmem %s6, 64
        %v1409 = vld [vmem:[%s1408] sm:$0xff]
        %v1410 = vld [vmem:[%s1408 + $0x8] sm:$0xff]
        %v1411 = vld [vmem:[%s1408 + $0x10] sm:$0xff]
        %v1412 = vld [vmem:[%s1408 + $0x18] sm:$0xff]
        %1413 = vmatprep.subr.mxu0 0.0
        %1414 = vmatpush1.msra.mxu0 %v1409
        %1415 = vmatprep.subr.mxu0 0.0
        %1416 = vmatpush1.msra.mxu0 %v1410
        %1417 = vmatprep.subr.mxu0 0.0
        %1418 = vmatpush1.msra.mxu0 %v1411
        %1419 = vmatprep.subr.mxu0 0.0
        %1420 = vmatpush1.msra.mxu0 %v1412
        %1421 = vmatprep.subr.mxu0 0.0
        %1422 = vmatpush1.msra.mxu0 0.0
        %1423 = vmatprep.subr.mxu0 0.0
        %1424 = vmatpush1.msra.mxu0 0.0
        %1425 = vmatprep.subr.mxu0 0.0
        %1426 = vmatpush1.msra.mxu0 0.0
        %1427 = vmatprep.subr.mxu0 0.0
        %1428 = vmatpush1.msra.mxu0 0.0
        %1429 = vmatprep.subr.mxu0 0.0
        %1430 = vmatpush1.msra.mxu0 0.0
        %1431 = vmatprep.subr.mxu0 0.0
        %1432 = vmatpush1.msra.mxu0 0.0
        %1433 = vmatprep.subr.mxu0 0.0
        %1434 = vmatpush1.msra.mxu0 0.0
        %1435 = vmatprep.subr.mxu0 0.0
        %1436 = vmatpush1.msra.mxu0 0.0
        %1437 = vmatprep.subr.mxu0 0.0
        %1438 = vmatpush1.msra.mxu0 0.0
        %1439 = vmatprep.subr.mxu0 0.0
        %1440 = vmatpush1.msra.mxu0 0.0
        %1441 = vmatprep.subr.mxu0 0.0
        %1442 = vmatpush1.msra.mxu0 0.0
        %1443 = vmatprep.subr.mxu0 0.0
        %1444 = vmatpush1.msra.mxu0 0.0
        %1445 = vmatprep.subr.mxu0 0.0
        %1446 = vmatpush1.msra.mxu0 0.0
        %1447 = vmatprep.subr.mxu0 0.0
        %1448 = vmatpush1.msra.mxu0 0.0
        %1449 = vmatprep.subr.mxu0 0.0
        %1450 = vmatpush1.msra.mxu0 0.0
        %1451 = vmatprep.subr.mxu0 0.0
        %1452 = vmatpush1.msra.mxu0 0.0
        %1453 = vmatprep.subr.mxu0 0.0
        %1454 = vmatpush1.msra.mxu0 0.0
        %1455 = vmatprep.subr.mxu0 0.0
        %1456 = vmatpush1.msra.mxu0 0.0
        %1457 = vmatprep.subr.mxu0 0.0
        %1458 = vmatpush1.msra.mxu0 0.0
        %1459 = vmatprep.subr.mxu0 0.0
        %1460 = vmatpush1.msra.mxu0 0.0
        %1461 = vmatprep.subr.mxu0 0.0
        %1462 = vmatpush1.msra.mxu0 0.0
        %1463 = vmatprep.subr.mxu0 0.0
        %1464 = vmatpush1.msra.mxu0 0.0
        %1465 = vmatprep.subr.mxu0 0.0
        %1466 = vmatpush1.msra.mxu0 0.0
        %1467 = vmatprep.subr.mxu0 0.0
        %1468 = vmatpush1.msra.mxu0 0.0
        %1469 = vmatprep.subr.mxu0 0.0
        %1470 = vmatpush1.msra.mxu0 0.0
        %1471 = vmatprep.subr.mxu0 0.0
        %1472 = vmatpush1.msra.mxu0 0.0
        %1473 = vmatprep.subr.mxu0 0.0
        %1474 = vmatpush1.msra.mxu0 0.0
        %1475 = vmatprep.subr.mxu0 0.0
        %1476 = vmatpush1.msra.mxu0 0.0
        %1477 = vmatprep.mubr.f32.mxu0 0.0
        %1478 = vmatmul.mubr.f32.gmra.mrb[0].mxu0 %v483
        %v1479 = vpop.f32.mrb[0].mxu0
        %v1480 = vadd.f32 0.0, %v1479
        %v1481 = vpop.f32.mrb[0].mxu0
        %1482 = vdwg.mxu0
        %v1484 = vsel %vm555, %v1330, 0
        %v1487 = vsel %vm555, %v1405, 0
        %1489 = vmatprep.subr.mxu0 0.0
        %1490 = vmatpush1.xpose.msra.mxu0 %v1487
        %1491 = vmatprep.subr.mxu0 0.0
        %1492 = vmatpush1.xpose.msra.mxu0 0.0
        %1493 = vmatprep.subr.mxu0 0.0
        %1494 = vmatpush1.xpose.msra.mxu0 0.0
        %1495 = vmatprep.subr.mxu0 0.0
        %1496 = vmatpush1.xpose.msra.mxu0 0.0
        %1497 = vmatprep.subr.mxu0 0.0
        %1498 = vmatpush1.xpose.msra.mxu0 0.0
        %1499 = vmatprep.subr.mxu0 0.0
        %1500 = vmatpush1.xpose.msra.mxu0 0.0
        %1501 = vmatprep.subr.mxu0 0.0
        %1502 = vmatpush1.xpose.msra.mxu0 0.0
        %1503 = vmatprep.subr.mxu0 0.0
        %1504 = vmatpush1.xpose.msra.mxu0 0.0
        %1505 = vmatprep.subr.mxu0 0.0
        %1506 = vmatpush1.xpose.msra.mxu0 0.0
        %1507 = vmatprep.subr.mxu0 0.0
        %1508 = vmatpush1.xpose.msra.mxu0 0.0
        %1509 = vmatprep.subr.mxu0 0.0
        %1510 = vmatpush1.xpose.msra.mxu0 0.0
        %1511 = vmatprep.subr.mxu0 0.0
        %1512 = vmatpush1.xpose.msra.mxu0 0.0
        %1513 = vmatprep.subr.mxu0 0.0
        %1514 = vmatpush1.xpose.msra.mxu0 0.0
        %1515 = vmatprep.subr.mxu0 0.0
        %1516 = vmatpush1.xpose.msra.mxu0 0.0
        %1517 = vmatprep.subr.mxu0 0.0
        %1518 = vmatpush1.xpose.msra.mxu0 0.0
        %1519 = vmatprep.subr.mxu0 0.0
        %1520 = vmatpush1.xpose.msra.mxu0 0.0
        %1521 = vmatprep.subr.mxu0 0.0
        %1522 = vmatpush1.xpose.msra.mxu0 0.0
        %1523 = vmatprep.subr.mxu0 0.0
        %1524 = vmatpush1.xpose.msra.mxu0 0.0
        %1525 = vmatprep.subr.mxu0 0.0
        %1526 = vmatpush1.xpose.msra.mxu0 0.0
        %1527 = vmatprep.subr.mxu0 0.0
        %1528 = vmatpush1.xpose.msra.mxu0 0.0
        %1529 = vmatprep.subr.mxu0 0.0
        %1530 = vmatpush1.xpose.msra.mxu0 0.0
        %1531 = vmatprep.subr.mxu0 0.0
        %1532 = vmatpush1.xpose.msra.mxu0 0.0
        %1533 = vmatprep.subr.mxu0 0.0
        %1534 = vmatpush1.xpose.msra.mxu0 0.0
        %1535 = vmatprep.subr.mxu0 0.0
        %1536 = vmatpush1.xpose.msra.mxu0 0.0
        %1537 = vmatprep.subr.mxu0 0.0
        %1538 = vmatpush1.xpose.msra.mxu0 0.0
        %1539 = vmatprep.subr.mxu0 0.0
        %1540 = vmatpush1.xpose.msra.mxu0 0.0
        %1541 = vmatprep.subr.mxu0 0.0
        %1542 = vmatpush1.xpose.msra.mxu0 0.0
        %1543 = vmatprep.subr.mxu0 0.0
        %1544 = vmatpush1.xpose.msra.mxu0 0.0
        %1545 = vmatprep.subr.mxu0 0.0
        %1546 = vmatpush1.xpose.msra.mxu0 0.0
        %1547 = vmatprep.subr.mxu0 0.0
        %1548 = vmatpush1.xpose.msra.mxu0 0.0
        %1549 = vmatprep.subr.mxu0 0.0
        %1550 = vmatpush1.xpose.msra.mxu0 0.0
        %1551 = vmatprep.subr.mxu0 0.0
        %1552 = vmatpush1.xpose.msra.mxu0 0.0
        %1553 = vmatprep.mubr.f32.mxu0 0.0
        %1554 = vmatmul.mubr.f32.gmra.mrb[0].mxu0 %v1484
        %v1555 = vpop.f32.mrb[0].mxu0
        %v1556 = vadd.f32 0.0, %v1555
        %v1557 = vpop.f32.mrb[0].mxu0
        %1558 = vdwg.mxu0
        %v1559 = vsel %vm322, %v1556, -1000000.0
        %v1560 = vsel %vm555, %v1559, -inf
        %1561 = vmax.xlane.f32.xlu0 %v1560
        %v1562 = vpop.xlane.xlu0 %1561
        %v1563 = vsub.f32 %v1559, %v1562
        %v1564 = vmul.f32 %v1563, 1.442695
        %v1565 = vpow.pop %v1564
        %v1566 = vsel %vm555, %v1565, 0.0
        %1567 = vadd.xlane.f32.xlu0 %v1566
        %v1568 = vpop.xlane.xlu0 %1567
        %v1569 = vrcp.pop %v1568
        %v1570 = vmul.f32 %v1568, %v1569
        %v1571 = vsub.f32 2.0, %v1570
        %v1572 = vmul.f32 %v1569, %v1571
        %v1574 = vsel %vm555, %v1565, 0
        %1576 = vmatprep.subr.mxu0 0.0
        %1577 = vmatpush1.msra.mxu0 %v1480
        %1578 = vmatprep.subr.mxu0 0.0
        %1579 = vmatpush1.msra.mxu0 0.0
        %1580 = vmatprep.subr.mxu0 0.0
        %1581 = vmatpush1.msra.mxu0 0.0
        %1582 = vmatprep.subr.mxu0 0.0
        %1583 = vmatpush1.msra.mxu0 0.0
        %1584 = vmatprep.subr.mxu0 0.0
        %1585 = vmatpush1.msra.mxu0 0.0
        %1586 = vmatprep.subr.mxu0 0.0
        %1587 = vmatpush1.msra.mxu0 0.0
        %1588 = vmatprep.subr.mxu0 0.0
        %1589 = vmatpush1.msra.mxu0 0.0
        %1590 = vmatprep.subr.mxu0 0.0
        %1591 = vmatpush1.msra.mxu0 0.0
        %1592 = vmatprep.subr.mxu0 0.0
        %1593 = vmatpush1.msra.mxu0 0.0
        %1594 = vmatprep.subr.mxu0 0.0
        %1595 = vmatpush1.msra.mxu0 0.0
        %1596 = vmatprep.subr.mxu0 0.0
        %1597 = vmatpush1.msra.mxu0 0.0
        %1598 = vmatprep.subr.mxu0 0.0
        %1599 = vmatpush1.msra.mxu0 0.0
        %1600 = vmatprep.subr.mxu0 0.0
        %1601 = vmatpush1.msra.mxu0 0.0
        %1602 = vmatprep.subr.mxu0 0.0
        %1603 = vmatpush1.msra.mxu0 0.0
        %1604 = vmatprep.subr.mxu0 0.0
        %1605 = vmatpush1.msra.mxu0 0.0
        %1606 = vmatprep.subr.mxu0 0.0
        %1607 = vmatpush1.msra.mxu0 0.0
        %1608 = vmatprep.subr.mxu0 0.0
        %1609 = vmatpush1.msra.mxu0 0.0
        %1610 = vmatprep.subr.mxu0 0.0
        %1611 = vmatpush1.msra.mxu0 0.0
        %1612 = vmatprep.subr.mxu0 0.0
        %1613 = vmatpush1.msra.mxu0 0.0
        %1614 = vmatprep.subr.mxu0 0.0
        %1615 = vmatpush1.msra.mxu0 0.0
        %1616 = vmatprep.subr.mxu0 0.0
        %1617 = vmatpush1.msra.mxu0 0.0
        %1618 = vmatprep.subr.mxu0 0.0
        %1619 = vmatpush1.msra.mxu0 0.0
        %1620 = vmatprep.subr.mxu0 0.0
        %1621 = vmatpush1.msra.mxu0 0.0
        %1622 = vmatprep.subr.mxu0 0.0
        %1623 = vmatpush1.msra.mxu0 0.0
        %1624 = vmatprep.subr.mxu0 0.0
        %1625 = vmatpush1.msra.mxu0 0.0
        %1626 = vmatprep.subr.mxu0 0.0
        %1627 = vmatpush1.msra.mxu0 0.0
        %1628 = vmatprep.subr.mxu0 0.0
        %1629 = vmatpush1.msra.mxu0 0.0
        %1630 = vmatprep.subr.mxu0 0.0
        %1631 = vmatpush1.msra.mxu0 0.0
        %1632 = vmatprep.subr.mxu0 0.0
        %1633 = vmatpush1.msra.mxu0 0.0
        %1634 = vmatprep.subr.mxu0 0.0
        %1635 = vmatpush1.msra.mxu0 0.0
        %1636 = vmatprep.subr.mxu0 0.0
        %1637 = vmatpush1.msra.mxu0 0.0
        %1638 = vmatprep.subr.mxu0 0.0
        %1639 = vmatpush1.msra.mxu0 0.0
        %1640 = vmatprep.mubr.f32.mxu0 0.0
        %1641 = vmatmul.mubr.f32.gmra.mrb[0].mxu0 %v1574
        %v1642 = vpop.f32.mrb[0].mxu0
        %v1643 = vadd.f32 0.0, %v1642
        %v1644 = vpop.f32.mrb[0].mxu0
        %1645 = vdwg.mxu0
        %v1646 = vmul.f32 %v1643, %v1572
        %s1647 = scalar_lea.vmem %s7, 16
        %v1648 = vld [vmem:[%s1647] sm:$0xff]
        %v1650 = vsel %vm555, %v1646, 0
        %1652 = vmatprep.subr.mxu0 0.0
        %1653 = vmatpush1.msra.mxu0 %v1648
        %1654 = vmatprep.subr.mxu0 0.0
        %1655 = vmatpush1.msra.mxu0 0.0
        %1656 = vmatprep.subr.mxu0 0.0
        %1657 = vmatpush1.msra.mxu0 0.0
        %1658 = vmatprep.subr.mxu0 0.0
        %1659 = vmatpush1.msra.mxu0 0.0
        %1660 = vmatprep.subr.mxu0 0.0
        %1661 = vmatpush1.msra.mxu0 0.0
        %1662 = vmatprep.subr.mxu0 0.0
        %1663 = vmatpush1.msra.mxu0 0.0
        %1664 = vmatprep.subr.mxu0 0.0
        %1665 = vmatpush1.msra.mxu0 0.0
        %1666 = vmatprep.subr.mxu0 0.0
        %1667 = vmatpush1.msra.mxu0 0.0
        %1668 = vmatprep.subr.mxu0 0.0
        %1669 = vmatpush1.msra.mxu0 0.0
        %1670 = vmatprep.subr.mxu0 0.0
        %1671 = vmatpush1.msra.mxu0 0.0
        %1672 = vmatprep.subr.mxu0 0.0
        %1673 = vmatpush1.msra.mxu0 0.0
        %1674 = vmatprep.subr.mxu0 0.0
        %1675 = vmatpush1.msra.mxu0 0.0
        %1676 = vmatprep.subr.mxu0 0.0
        %1677 = vmatpush1.msra.mxu0 0.0
        %1678 = vmatprep.subr.mxu0 0.0
        %1679 = vmatpush1.msra.mxu0 0.0
        %1680 = vmatprep.subr.mxu0 0.0
        %1681 = vmatpush1.msra.mxu0 0.0
        %1682 = vmatprep.subr.mxu0 0.0
        %1683 = vmatpush1.msra.mxu0 0.0
        %1684 = vmatprep.subr.mxu0 0.0
        %1685 = vmatpush1.msra.mxu0 0.0
        %1686 = vmatprep.subr.mxu0 0.0
        %1687 = vmatpush1.msra.mxu0 0.0
        %1688 = vmatprep.subr.mxu0 0.0
        %1689 = vmatpush1.msra.mxu0 0.0
        %1690 = vmatprep.subr.mxu0 0.0
        %1691 = vmatpush1.msra.mxu0 0.0
        %1692 = vmatprep.subr.mxu0 0.0
        %1693 = vmatpush1.msra.mxu0 0.0
        %1694 = vmatprep.subr.mxu0 0.0
        %1695 = vmatpush1.msra.mxu0 0.0
        %1696 = vmatprep.subr.mxu0 0.0
        %1697 = vmatpush1.msra.mxu0 0.0
        %1698 = vmatprep.subr.mxu0 0.0
        %1699 = vmatpush1.msra.mxu0 0.0
        %1700 = vmatprep.subr.mxu0 0.0
        %1701 = vmatpush1.msra.mxu0 0.0
        %1702 = vmatprep.subr.mxu0 0.0
        %1703 = vmatpush1.msra.mxu0 0.0
        %1704 = vmatprep.subr.mxu0 0.0
        %1705 = vmatpush1.msra.mxu0 0.0
        %1706 = vmatprep.subr.mxu0 0.0
        %1707 = vmatpush1.msra.mxu0 0.0
        %1708 = vmatprep.subr.mxu0 0.0
        %1709 = vmatpush1.msra.mxu0 0.0
        %1710 = vmatprep.subr.mxu0 0.0
        %1711 = vmatpush1.msra.mxu0 0.0
        %1712 = vmatprep.subr.mxu0 0.0
        %1713 = vmatpush1.msra.mxu0 0.0
        %1714 = vmatprep.subr.mxu0 0.0
        %1715 = vmatpush1.msra.mxu0 0.0
        %1716 = vmatprep.mubr.f32.mxu0 0.0
        %1717 = vmatmul.mubr.f32.gmra.mrb[0].mxu0 %v1650
        %v1718 = vpop.f32.mrb[0].mxu0
        %v1719 = vadd.f32 0.0, %v1718
        %v1720 = vpop.f32.mrb[0].mxu0
        %1721 = vdwg.mxu0
        %v1722 = vadd.f32 %v1255, %v1719
        %s1723 = scalar_lea.vmem %s4, 96
        %v1724 = vld [vmem:[%s1723] sm:$0xff]
        %v1725 = vld [vmem:[%s1723 + $0x8] sm:$0xff]
        %v1726 = vld [vmem:[%s1723 + $0x10] sm:$0xff]
        %v1727 = vld [vmem:[%s1723 + $0x18] sm:$0xff]
        %1728 = vmatprep.subr.mxu0 0.0
        %1729 = vmatpush1.msra.mxu0 %v1724
        %1730 = vmatprep.subr.mxu0 0.0
        %1731 = vmatpush1.msra.mxu0 %v1725
        %1732 = vmatprep.subr.mxu0 0.0
        %1733 = vmatpush1.msra.mxu0 %v1726
        %1734 = vmatprep.subr.mxu0 0.0
        %1735 = vmatpush1.msra.mxu0 %v1727
        %1736 = vmatprep.subr.mxu0 0.0
        %1737 = vmatpush1.msra.mxu0 0.0
        %1738 = vmatprep.subr.mxu0 0.0
        %1739 = vmatpush1.msra.mxu0 0.0
        %1740 = vmatprep.subr.mxu0 0.0
        %1741 = vmatpush1.msra.mxu0 0.0
        %1742 = vmatprep.subr.mxu0 0.0
        %1743 = vmatpush1.msra.mxu0 0.0
        %1744 = vmatprep.subr.mxu0 0.0
        %1745 = vmatpush1.msra.mxu0 0.0
        %1746 = vmatprep.subr.mxu0 0.0
        %1747 = vmatpush1.msra.mxu0 0.0
        %1748 = vmatprep.subr.mxu0 0.0
        %1749 = vmatpush1.msra.mxu0 0.0
        %1750 = vmatprep.subr.mxu0 0.0
        %1751 = vmatpush1.msra.mxu0 0.0
        %1752 = vmatprep.subr.mxu0 0.0
        %1753 = vmatpush1.msra.mxu0 0.0
        %1754 = vmatprep.subr.mxu0 0.0
        %1755 = vmatpush1.msra.mxu0 0.0
        %1756 = vmatprep.subr.mxu0 0.0
        %1757 = vmatpush1.msra.mxu0 0.0
        %1758 = vmatprep.subr.mxu0 0.0
        %1759 = vmatpush1.msra.mxu0 0.0
        %1760 = vmatprep.subr.mxu0 0.0
        %1761 = vmatpush1.msra.mxu0 0.0
        %1762 = vmatprep.subr.mxu0 0.0
        %1763 = vmatpush1.msra.mxu0 0.0
        %1764 = vmatprep.subr.mxu0 0.0
        %1765 = vmatpush1.msra.mxu0 0.0
        %1766 = vmatprep.subr.mxu0 0.0
        %1767 = vmatpush1.msra.mxu0 0.0
        %1768 = vmatprep.subr.mxu0 0.0
        %1769 = vmatpush1.msra.mxu0 0.0
        %1770 = vmatprep.subr.mxu0 0.0
        %1771 = vmatpush1.msra.mxu0 0.0
        %1772 = vmatprep.subr.mxu0 0.0
        %1773 = vmatpush1.msra.mxu0 0.0
        %1774 = vmatprep.subr.mxu0 0.0
        %1775 = vmatpush1.msra.mxu0 0.0
        %1776 = vmatprep.subr.mxu0 0.0
        %1777 = vmatpush1.msra.mxu0 0.0
        %1778 = vmatprep.subr.mxu0 0.0
        %1779 = vmatpush1.msra.mxu0 0.0
        %1780 = vmatprep.subr.mxu0 0.0
        %1781 = vmatpush1.msra.mxu0 0.0
        %1782 = vmatprep.subr.mxu0 0.0
        %1783 = vmatpush1.msra.mxu0 0.0
        %1784 = vmatprep.subr.mxu0 0.0
        %1785 = vmatpush1.msra.mxu0 0.0
        %1786 = vmatprep.subr.mxu0 0.0
        %1787 = vmatpush1.msra.mxu0 0.0
        %1788 = vmatprep.subr.mxu0 0.0
        %1789 = vmatpush1.msra.mxu0 0.0
        %1790 = vmatprep.subr.mxu0 0.0
        %1791 = vmatpush1.msra.mxu0 0.0
        %1792 = vmatprep.mubr.f32.mxu0 0.0
        %1793 = vmatmul.mubr.f32.gmra.mrb[0].mxu0 %v329
        %v1794 = vpop.f32.mrb[0].mxu0
        %v1795 = vadd.f32 0.0, %v1794
        %v1796 = vpop.f32.mrb[0].mxu0
        %1797 = vdwg.mxu0
        %s1798 = scalar_lea.vmem %s5, 96
        %v1799 = vld [vmem:[%s1798] sm:$0xff]
        %v1800 = vld [vmem:[%s1798 + $0x8] sm:$0xff]
        %v1801 = vld [vmem:[%s1798 + $0x10] sm:$0xff]
        %v1802 = vld [vmem:[%s1798 + $0x18] sm:$0xff]
        %1803 = vmatprep.subr.mxu0 0.0
        %1804 = vmatpush1.msra.mxu0 %v1799
        %1805 = vmatprep.subr.mxu0 0.0
        %1806 = vmatpush1.msra.mxu0 %v1800
        %1807 = vmatprep.subr.mxu0 0.0
        %1808 = vmatpush1.msra.mxu0 %v1801
        %1809 = vmatprep.subr.mxu0 0.0
        %1810 = vmatpush1.msra.mxu0 %v1802
        %1811 = vmatprep.subr.mxu0 0.0
        %1812 = vmatpush1.msra.mxu0 0.0
        %1813 = vmatprep.subr.mxu0 0.0
        %1814 = vmatpush1.msra.mxu0 0.0
        %1815 = vmatprep.subr.mxu0 0.0
        %1816 = vmatpush1.msra.mxu0 0.0
        %1817 = vmatprep.subr.mxu0 0.0
        %1818 = vmatpush1.msra.mxu0 0.0
        %1819 = vmatprep.subr.mxu0 0.0
        %1820 = vmatpush1.msra.mxu0 0.0
        %1821 = vmatprep.subr.mxu0 0.0
        %1822 = vmatpush1.msra.mxu0 0.0
        %1823 = vmatprep.subr.mxu0 0.0
        %1824 = vmatpush1.msra.mxu0 0.0
        %1825 = vmatprep.subr.mxu0 0.0
        %1826 = vmatpush1.msra.mxu0 0.0
        %1827 = vmatprep.subr.mxu0 0.0
        %1828 = vmatpush1.msra.mxu0 0.0
        %1829 = vmatprep.subr.mxu0 0.0
        %1830 = vmatpush1.msra.mxu0 0.0
        %1831 = vmatprep.subr.mxu0 0.0
        %1832 = vmatpush1.msra.mxu0 0.0
        %1833 = vmatprep.subr.mxu0 0.0
        %1834 = vmatpush1.msra.mxu0 0.0
        %1835 = vmatprep.subr.mxu0 0.0
        %1836 = vmatpush1.msra.mxu0 0.0
        %1837 = vmatprep.subr.mxu0 0.0
        %1838 = vmatpush1.msra.mxu0 0.0
        %1839 = vmatprep.subr.mxu0 0.0
        %1840 = vmatpush1.msra.mxu0 0.0
        %1841 = vmatprep.subr.mxu0 0.0
        %1842 = vmatpush1.msra.mxu0 0.0
        %1843 = vmatprep.subr.mxu0 0.0
        %1844 = vmatpush1.msra.mxu0 0.0
        %1845 = vmatprep.subr.mxu0 0.0
        %1846 = vmatpush1.msra.mxu0 0.0
        %1847 = vmatprep.subr.mxu0 0.0
        %1848 = vmatpush1.msra.mxu0 0.0
        %1849 = vmatprep.subr.mxu0 0.0
        %1850 = vmatpush1.msra.mxu0 0.0
        %1851 = vmatprep.subr.mxu0 0.0
        %1852 = vmatpush1.msra.mxu0 0.0
        %1853 = vmatprep.subr.mxu0 0.0
        %1854 = vmatpush1.msra.mxu0 0.0
        %1855 = vmatprep.subr.mxu0 0.0
        %1856 = vmatpush1.msra.mxu0 0.0
        %1857 = vmatprep.subr.mxu0 0.0
        %1858 = vmatpush1.msra.mxu0 0.0
        %1859 = vmatprep.subr.mxu0 0.0
        %1860 = vmatpush1.msra.mxu0 0.0
        %1861 = vmatprep.subr.mxu0 0.0
        %1862 = vmatpush1.msra.mxu0 0.0
        %1863 = vmatprep.subr.mxu0 0.0
        %1864 = vmatpush1.msra.mxu0 0.0
        %1865 = vmatprep.subr.mxu0 0.0
        %1866 = vmatpush1.msra.mxu0 0.0
        %1867 = vmatprep.mubr.f32.mxu0 0.0
        %1868 = vmatmul.mubr.f32.gmra.mrb[0].mxu0 %v406
        %v1869 = vpop.f32.mrb[0].mxu0
        %v1870 = vadd.f32 0.0, %v1869
        %v1871 = vpop.f32.mrb[0].mxu0
        %1872 = vdwg.mxu0
        %s1873 = scalar_lea.vmem %s6, 96
        %v1874 = vld [vmem:[%s1873] sm:$0xff]
        %v1875 = vld [vmem:[%s1873 + $0x8] sm:$0xff]
        %v1876 = vld [vmem:[%s1873 + $0x10] sm:$0xff]
        %v1877 = vld [vmem:[%s1873 + $0x18] sm:$0xff]
        %1878 = vmatprep.subr.mxu0 0.0
        %1879 = vmatpush1.msra.mxu0 %v1874
        %1880 = vmatprep.subr.mxu0 0.0
        %1881 = vmatpush1.msra.mxu0 %v1875
        %1882 = vmatprep.subr.mxu0 0.0
        %1883 = vmatpush1.msra.mxu0 %v1876
        %1884 = vmatprep.subr.mxu0 0.0
        %1885 = vmatpush1.msra.mxu0 %v1877
        %1886 = vmatprep.subr.mxu0 0.0
        %1887 = vmatpush1.msra.mxu0 0.0
        %1888 = vmatprep.subr.mxu0 0.0
        %1889 = vmatpush1.msra.mxu0 0.0
        %1890 = vmatprep.subr.mxu0 0.0
        %1891 = vmatpush1.msra.mxu0 0.0
        %1892 = vmatprep.subr.mxu0 0.0
        %1893 = vmatpush1.msra.mxu0 0.0
        %1894 = vmatprep.subr.mxu0 0.0
        %1895 = vmatpush1.msra.mxu0 0.0
        %1896 = vmatprep.subr.mxu0 0.0
        %1897 = vmatpush1.msra.mxu0 0.0
        %1898 = vmatprep.subr.mxu0 0.0
        %1899 = vmatpush1.msra.mxu0 0.0
        %1900 = vmatprep.subr.mxu0 0.0
        %1901 = vmatpush1.msra.mxu0 0.0
        %1902 = vmatprep.subr.mxu0 0.0
        %1903 = vmatpush1.msra.mxu0 0.0
        %1904 = vmatprep.subr.mxu0 0.0
        %1905 = vmatpush1.msra.mxu0 0.0
        %1906 = vmatprep.subr.mxu0 0.0
        %1907 = vmatpush1.msra.mxu0 0.0
        %1908 = vmatprep.subr.mxu0 0.0
        %1909 = vmatpush1.msra.mxu0 0.0
        %1910 = vmatprep.subr.mxu0 0.0
        %1911 = vmatpush1.msra.mxu0 0.0
        %1912 = vmatprep.subr.mxu0 0.0
        %1913 = vmatpush1.msra.mxu0 0.0
        %1914 = vmatprep.subr.mxu0 0.0
        %1915 = vmatpush1.msra.mxu0 0.0
        %1916 = vmatprep.subr.mxu0 0.0
        %1917 = vmatpush1.msra.mxu0 0.0
        %1918 = vmatprep.subr.mxu0 0.0
        %1919 = vmatpush1.msra.mxu0 0.0
        %1920 = vmatprep.subr.mxu0 0.0
        %1921 = vmatpush1.msra.mxu0 0.0
        %1922 = vmatprep.subr.mxu0 0.0
        %1923 = vmatpush1.msra.mxu0 0.0
        %1924 = vmatprep.subr.mxu0 0.0
        %1925 = vmatpush1.msra.mxu0 0.0
        %1926 = vmatprep.subr.mxu0 0.0
        %1927 = vmatpush1.msra.mxu0 0.0
        %1928 = vmatprep.subr.mxu0 0.0
        %1929 = vmatpush1.msra.mxu0 0.0
        %1930 = vmatprep.subr.mxu0 0.0
        %1931 = vmatpush1.msra.mxu0 0.0
        %1932 = vmatprep.subr.mxu0 0.0
        %1933 = vmatpush1.msra.mxu0 0.0
        %1934 = vmatprep.subr.mxu0 0.0
        %1935 = vmatpush1.msra.mxu0 0.0
        %1936 = vmatprep.subr.mxu0 0.0
        %1937 = vmatpush1.msra.mxu0 0.0
        %1938 = vmatprep.subr.mxu0 0.0
        %1939 = vmatpush1.msra.mxu0 0.0
        %1940 = vmatprep.subr.mxu0 0.0
        %1941 = vmatpush1.msra.mxu0 0.0
        %1942 = vmatprep.mubr.f32.mxu0 0.0
        %1943 = vmatmul.mubr.f32.gmra.mrb[0].mxu0 %v483
        %v1944 = vpop.f32.mrb[0].mxu0
        %v1945 = vadd.f32 0.0, %v1944
        %v1946 = vpop.f32.mrb[0].mxu0
        %1947 = vdwg.mxu0
        %v1949 = vsel %vm555, %v1795, 0
        %v1952 = vsel %vm555, %v1870, 0
        %1954 = vmatprep.subr.mxu0 0.0
        %1955 = vmatpush1.xpose.msra.mxu0 %v1952
        %1956 = vmatprep.subr.mxu0 0.0
        %1957 = vmatpush1.xpose.msra.mxu0 0.0
        %1958 = vmatprep.subr.mxu0 0.0
        %1959 = vmatpush1.xpose.msra.mxu0 0.0
        %1960 = vmatprep.subr.mxu0 0.0
        %1961 = vmatpush1.xpose.msra.mxu0 0.0
        %1962 = vmatprep.subr.mxu0 0.0
        %1963 = vmatpush1.xpose.msra.mxu0 0.0
        %1964 = vmatprep.subr.mxu0 0.0
        %1965 = vmatpush1.xpose.msra.mxu0 0.0
        %1966 = vmatprep.subr.mxu0 0.0
        %1967 = vmatpush1.xpose.msra.mxu0 0.0
        %1968 = vmatprep.subr.mxu0 0.0
        %1969 = vmatpush1.xpose.msra.mxu0 0.0
        %1970 = vmatprep.subr.mxu0 0.0
        %1971 = vmatpush1.xpose.msra.mxu0 0.0
        %1972 = vmatprep.subr.mxu0 0.0
        %1973 = vmatpush1.xpose.msra.mxu0 0.0
        %1974 = vmatprep.subr.mxu0 0.0
        %1975 = vmatpush1.xpose.msra.mxu0 0.0
        %1976 = vmatprep.subr.mxu0 0.0
        %1977 = vmatpush1.xpose.msra.mxu0 0.0
        %1978 = vmatprep.subr.mxu0 0.0
        %1979 = vmatpush1.xpose.msra.mxu0 0.0
        %1980 = vmatprep.subr.mxu0 0.0
        %1981 = vmatpush1.xpose.msra.mxu0 0.0
        %1982 = vmatprep.subr.mxu0 0.0
        %1983 = vmatpush1.xpose.msra.mxu0 0.0
        %1984 = vmatprep.subr.mxu0 0.0
        %1985 = vmatpush1.xpose.msra.mxu0 0.0
        %1986 = vmatprep.subr.mxu0 0.0
        %1987 = vmatpush1.xpose.msra.mxu0 0.0
        %1988 = vmatprep.subr.mxu0 0.0
        %1989 = vmatpush1.xpose.msra.mxu0 0.0
        %1990 = vmatprep.subr.mxu0 0.0
        %1991 = vmatpush1.xpose.msra.mxu0 0.0
        %1992 = vmatprep.subr.mxu0 0.0
        %1993 = vmatpush1.xpose.msra.mxu0 0.0
        %1994 = vmatprep.subr.mxu0 0.0
        %1995 = vmatpush1.xpose.msra.mxu0 0.0
        %1996 = vmatprep.subr.mxu0 0.0
        %1997 = vmatpush1.xpose.msra.mxu0 0.0
        %1998 = vmatprep.subr.mxu0 0.0
        %1999 = vmatpush1.xpose.msra.mxu0 0.0
        %2000 = vmatprep.subr.mxu0 0.0
        %2001 = vmatpush1.xpose.msra.mxu0 0.0
        %2002 = vmatprep.subr.mxu0 0.0
        %2003 = vmatpush1.xpose.msra.mxu0 0.0
        %2004 = vmatprep.subr.mxu0 0.0
        %2005 = vmatpush1.xpose.msra.mxu0 0.0
        %2006 = vmatprep.subr.mxu0 0.0
        %2007 = vmatpush1.xpose.msra.mxu0 0.0
        %2008 = vmatprep.subr.mxu0 0.0
        %2009 = vmatpush1.xpose.msra.mxu0 0.0
        %2010 = vmatprep.subr.mxu0 0.0
        %2011 = vmatpush1.xpose.msra.mxu0 0.0
        %2012 = vmatprep.subr.mxu0 0.0
        %2013 = vmatpush1.xpose.msra.mxu0 0.0
        %2014 = vmatprep.subr.mxu0 0.0
        %2015 = vmatpush1.xpose.msra.mxu0 0.0
        %2016 = vmatprep.subr.mxu0 0.0
        %2017 = vmatpush1.xpose.msra.mxu0 0.0
        %2018 = vmatprep.mubr.f32.mxu0 0.0
        %2019 = vmatmul.mubr.f32.gmra.mrb[0].mxu0 %v1949
        %v2020 = vpop.f32.mrb[0].mxu0
        %v2021 = vadd.f32 0.0, %v2020
        %v2022 = vpop.f32.mrb[0].mxu0
        %2023 = vdwg.mxu0
        %v2024 = vsel %vm322, %v2021, -1000000.0
        %v2025 = vsel %vm555, %v2024, -inf
        %2026 = vmax.xlane.f32.xlu0 %v2025
        %v2027 = vpop.xlane.xlu0 %2026
        %v2028 = vsub.f32 %v2024, %v2027
        %v2029 = vmul.f32 %v2028, 1.442695
        %v2030 = vpow.pop %v2029
        %v2031 = vsel %vm555, %v2030, 0.0
        %2032 = vadd.xlane.f32.xlu0 %v2031
        %v2033 = vpop.xlane.xlu0 %2032
        %v2034 = vrcp.pop %v2033
        %v2035 = vmul.f32 %v2033, %v2034
        %v2036 = vsub.f32 2.0, %v2035
        %v2037 = vmul.f32 %v2034, %v2036
        %v2039 = vsel %vm555, %v2030, 0
        %2041 = vmatprep.subr.mxu0 0.0
        %2042 = vmatpush1.msra.mxu0 %v1945
        %2043 = vmatprep.subr.mxu0 0.0
        %2044 = vmatpush1.msra.mxu0 0.0
        %2045 = vmatprep.subr.mxu0 0.0
        %2046 = vmatpush1.msra.mxu0 0.0
        %2047 = vmatprep.subr.mxu0 0.0
        %2048 = vmatpush1.msra.mxu0 0.0
        %2049 = vmatprep.subr.mxu0 0.0
        %2050 = vmatpush1.msra.mxu0 0.0
        %2051 = vmatprep.subr.mxu0 0.0
        %2052 = vmatpush1.msra.mxu0 0.0
        %2053 = vmatprep.subr.mxu0 0.0
        %2054 = vmatpush1.msra.mxu0 0.0
        %2055 = vmatprep.subr.mxu0 0.0
        %2056 = vmatpush1.msra.mxu0 0.0
        %2057 = vmatprep.subr.mxu0 0.0
        %2058 = vmatpush1.msra.mxu0 0.0
        %2059 = vmatprep.subr.mxu0 0.0
        %2060 = vmatpush1.msra.mxu0 0.0
        %2061 = vmatprep.subr.mxu0 0.0
        %2062 = vmatpush1.msra.mxu0 0.0
        %2063 = vmatprep.subr.mxu0 0.0
        %2064 = vmatpush1.msra.mxu0 0.0
        %2065 = vmatprep.subr.mxu0 0.0
        %2066 = vmatpush1.msra.mxu0 0.0
        %2067 = vmatprep.subr.mxu0 0.0
        %2068 = vmatpush1.msra.mxu0 0.0
        %2069 = vmatprep.subr.mxu0 0.0
        %2070 = vmatpush1.msra.mxu0 0.0
        %2071 = vmatprep.subr.mxu0 0.0
        %2072 = vmatpush1.msra.mxu0 0.0
        %2073 = vmatprep.subr.mxu0 0.0
        %2074 = vmatpush1.msra.mxu0 0.0
        %2075 = vmatprep.subr.mxu0 0.0
        %2076 = vmatpush1.msra.mxu0 0.0
        %2077 = vmatprep.subr.mxu0 0.0
        %2078 = vmatpush1.msra.mxu0 0.0
        %2079 = vmatprep.subr.mxu0 0.0
        %2080 = vmatpush1.msra.mxu0 0.0
        %2081 = vmatprep.subr.mxu0 0.0
        %2082 = vmatpush1.msra.mxu0 0.0
        %2083 = vmatprep.subr.mxu0 0.0
        %2084 = vmatpush1.msra.mxu0 0.0
        %2085 = vmatprep.subr.mxu0 0.0
        %2086 = vmatpush1.msra.mxu0 0.0
        %2087 = vmatprep.subr.mxu0 0.0
        %2088 = vmatpush1.msra.mxu0 0.0
        %2089 = vmatprep.subr.mxu0 0.0
        %2090 = vmatpush1.msra.mxu0 0.0
        %2091 = vmatprep.subr.mxu0 0.0
        %2092 = vmatpush1.msra.mxu0 0.0
        %2093 = vmatprep.subr.mxu0 0.0
        %2094 = vmatpush1.msra.mxu0 0.0
        %2095 = vmatprep.subr.mxu0 0.0
        %2096 = vmatpush1.msra.mxu0 0.0
        %2097 = vmatprep.subr.mxu0 0.0
        %2098 = vmatpush1.msra.mxu0 0.0
        %2099 = vmatprep.subr.mxu0 0.0
        %2100 = vmatpush1.msra.mxu0 0.0
        %2101 = vmatprep.subr.mxu0 0.0
        %2102 = vmatpush1.msra.mxu0 0.0
        %2103 = vmatprep.subr.mxu0 0.0
        %2104 = vmatpush1.msra.mxu0 0.0
        %2105 = vmatprep.mubr.f32.mxu0 0.0
        %2106 = vmatmul.mubr.f32.gmra.mrb[0].mxu0 %v2039
        %v2107 = vpop.f32.mrb[0].mxu0
        %v2108 = vadd.f32 0.0, %v2107
        %v2109 = vpop.f32.mrb[0].mxu0
        %2110 = vdwg.mxu0
        %v2111 = vmul.f32 %v2108, %v2037
        %s2112 = scalar_lea.vmem %s7, 24
        %v2113 = vld [vmem:[%s2112] sm:$0xff]
        %v2115 = vsel %vm555, %v2111, 0
        %2117 = vmatprep.subr.mxu0 0.0
        %2118 = vmatpush1.msra.mxu0 %v2113
        %2119 = vmatprep.subr.mxu0 0.0
        %2120 = vmatpush1.msra.mxu0 0.0
        %2121 = vmatprep.subr.mxu0 0.0
        %2122 = vmatpush1.msra.mxu0 0.0
        %2123 = vmatprep.subr.mxu0 0.0
        %2124 = vmatpush1.msra.mxu0 0.0
        %2125 = vmatprep.subr.mxu0 0.0
        %2126 = vmatpush1.msra.mxu0 0.0
        %2127 = vmatprep.subr.mxu0 0.0
        %2128 = vmatpush1.msra.mxu0 0.0
        %2129 = vmatprep.subr.mxu0 0.0
        %2130 = vmatpush1.msra.mxu0 0.0
        %2131 = vmatprep.subr.mxu0 0.0
        %2132 = vmatpush1.msra.mxu0 0.0
        %2133 = vmatprep.subr.mxu0 0.0
        %2134 = vmatpush1.msra.mxu0 0.0
        %2135 = vmatprep.subr.mxu0 0.0
        %2136 = vmatpush1.msra.mxu0 0.0
        %2137 = vmatprep.subr.mxu0 0.0
        %2138 = vmatpush1.msra.mxu0 0.0
        %2139 = vmatprep.subr.mxu0 0.0
        %2140 = vmatpush1.msra.mxu0 0.0
        %2141 = vmatprep.subr.mxu0 0.0
        %2142 = vmatpush1.msra.mxu0 0.0
        %2143 = vmatprep.subr.mxu0 0.0
        %2144 = vmatpush1.msra.mxu0 0.0
        %2145 = vmatprep.subr.mxu0 0.0
        %2146 = vmatpush1.msra.mxu0 0.0
        %2147 = vmatprep.subr.mxu0 0.0
        %2148 = vmatpush1.msra.mxu0 0.0
        %2149 = vmatprep.subr.mxu0 0.0
        %2150 = vmatpush1.msra.mxu0 0.0
        %2151 = vmatprep.subr.mxu0 0.0
        %2152 = vmatpush1.msra.mxu0 0.0
        %2153 = vmatprep.subr.mxu0 0.0
        %2154 = vmatpush1.msra.mxu0 0.0
        %2155 = vmatprep.subr.mxu0 0.0
        %2156 = vmatpush1.msra.mxu0 0.0
        %2157 = vmatprep.subr.mxu0 0.0
        %2158 = vmatpush1.msra.mxu0 0.0
        %2159 = vmatprep.subr.mxu0 0.0
        %2160 = vmatpush1.msra.mxu0 0.0
        %2161 = vmatprep.subr.mxu0 0.0
        %2162 = vmatpush1.msra.mxu0 0.0
        %2163 = vmatprep.subr.mxu0 0.0
        %2164 = vmatpush1.msra.mxu0 0.0
        %2165 = vmatprep.subr.mxu0 0.0
        %2166 = vmatpush1.msra.mxu0 0.0
        %2167 = vmatprep.subr.mxu0 0.0
        %2168 = vmatpush1.msra.mxu0 0.0
        %2169 = vmatprep.subr.mxu0 0.0
        %2170 = vmatpush1.msra.mxu0 0.0
        %2171 = vmatprep.subr.mxu0 0.0
        %2172 = vmatpush1.msra.mxu0 0.0
        %2173 = vmatprep.subr.mxu0 0.0
        %2174 = vmatpush1.msra.mxu0 0.0
        %2175 = vmatprep.subr.mxu0 0.0
        %2176 = vmatpush1.msra.mxu0 0.0
        %2177 = vmatprep.subr.mxu0 0.0
        %2178 = vmatpush1.msra.mxu0 0.0
        %2179 = vmatprep.subr.mxu0 0.0
        %2180 = vmatpush1.msra.mxu0 0.0
        %2181 = vmatprep.mubr.f32.mxu0 0.0
        %2182 = vmatmul.mubr.f32.gmra.mrb[0].mxu0 %v2115
        %v2183 = vpop.f32.mrb[0].mxu0
        %v2184 = vadd.f32 0.0, %v2183
        %v2185 = vpop.f32.mrb[0].mxu0
        %2186 = vdwg.mxu0
        %v2187 = vadd.f32 %v1722, %v2184
        %2188 = vst [vmem:[%s302] sm:$0xff] %v2187
        %s2189 = sand.u32 %s198, 1
        %s2190 = scalar_lea.sflag [#allocation5], %s2189
        %s2191 = sand.u32 %s198, 1
        %s2192 = smul.addr %s2191, 8
        %s2193 = scalar_lea.vmem [#allocation4], %s2192
        // Predicated region
        $region49: #{tpu_custom_call.1} parent=47 // pred_check
          %p2194 = pneg %p208
        $region50: #{tpu_custom_call.1} parent=47 // pred_check_branch
          %2196 = sbr.rel (%p2194) target = $region52
        $region51: #{tpu_custom_call.1} parent=47 // pred_region
          %s2198 = ssub.s32 128, 128
          %2199 = vsyncadd %s2190, %s2198
          %s2200 = smul.addr %s28, 128
          %s2201 = scalar_lea.hbm %s8, %s2200
          %s2203 = sshll.u32 %s2193, 4
          %s2204 = int_to_ptr.vmem [resolvable:$true] %s2203
          %2206 = dma.vmem_to_hbm [thread:$0]  %s2204, 128, %s2201, %s2190
        $region52: #{tpu_custom_call.1} parent=47 // pred_fallthru
          _
      $region48: #{tpu_custom_call.1} parent=5 // pred_fallthru
        _
      %p2207 = scmp.le.s32.totalorder 2, %s23
      // Predicated region
      $region53: #{tpu_custom_call.1} parent=5 // pred_check
        %p2208 = pneg %p2207
      $region54: #{tpu_custom_call.1} parent=5 // pred_check_branch
        %2210 = sbr.rel (%p2208) target = $region56
      $region55: #{tpu_custom_call.1} parent=5 // pred_region
        %s2211 = ssub.s32 %s23, 2
        // Predicated region
        $region57: #{tpu_custom_call.1} parent=55 // pred_check
          %p2212 = pneg %p214
        $region58: #{tpu_custom_call.1} parent=55 // pred_check_branch
          %2214 = sbr.rel (%p2212) target = $region60
        $region59: #{tpu_custom_call.1} parent=55 // pred_region
          %s2215 = sand.u32 %s199, 1
          %s2216 = scalar_lea.sflag [#allocation5], %s2215
          %s2217 = sand.u32 %s199, 1
          %s2218 = smul.addr %s2217, 8
          %s2219 = scalar_lea.vmem [#allocation4], %s2218
          %2220 = dma.done %s2216, 128
        $region60: #{tpu_custom_call.1} parent=55 // pred_fallthru
          _
      $region56: #{tpu_custom_call.1} parent=5 // pred_fallthru
        _
    $region6: #{tpu_custom_call.1} parent=1 // loop_footer
      %s27 = sadd.s32 1, %s23
    $region7: #{tpu_custom_call.1} parent=1 // loop_footer_branch
      %22 = sbr.rel target = $region3
    $region8: #{tpu_custom_call.1} parent=1 // loop_exit
      _
    %2221 = vsyncpa [#allocation5], 1
    %s2222 = scalar_lea.sflag [#allocation5], 1
    %2223 = vsyncpa %s2222, 1

</llo_original>
